<compile_context>
chip_gen: v6e
topology: v6e:2x2x1
jax: 0.10.0
libtpu: 0.0.40
codegen_flags: <defaults>
</compile_context>

<pallas_src>
import functools

import jax
import jax.numpy as jnp
from jax.experimental import pallas as pl
from jax.experimental.pallas import tpu as pltpu

BN_EPS = 1e-5   # regnet_cfg.BN.EPS default
# regnet_cfg.BN.MOM only affects running-stat updates (training), not the
# inference forward math implemented here.


# --------------------------------------------------------------------------
# Fused Pallas kernel: 7x7/s2 conv (7 shifted matmuls) + BN + ReLU + 3x3/s2 pool
# --------------------------------------------------------------------------
def _stem_kernel(xe_ref, xo_ref, we_ref, wo_ref, scale_ref, shift_ref,
                 o_ref, acc_ref, yscr_ref, *, TP, Ho, Wo, Qo):
    # xe_ref / xo_ref: (RE*Wo, 7*C_in) bf16 -- even / odd padded-input rows of
    #                  this band, already width-unrolled (kw,ci flattened).
    # we_ref: (4, 7*C_in, C_out) bf16 -- weights for even kh = 0,2,4,6
    # wo_ref: (3, 7*C_in, C_out) bf16 -- weights for odd  kh = 1,3,5
    # scale_ref / shift_ref: (1, C_out) f32 -- folded BatchNorm affine
    # o_ref: (TP, Qo, C_out) f32 -- pooled output rows of this band
    # acc_ref:  VMEM (R*Wo, C_out) f32   -- conv accumulator (R = 2*TP+1 rows)
    # yscr_ref: VMEM (R, 2*Qo+1, C_out) f32 -- W-padded ReLU'd rows for pooling
    R = 2 * TP + 1
    C = o_ref.shape[-1]

    # ---- conv as 7 shifted matmuls (kh loop), accumulated in f32 VMEM ------
    lhs = xe_ref[0:R * Wo, :]                                     # kh = 0
    acc_ref[...] = jnp.dot(lhs, we_ref[0], preferred_element_type=jnp.float32)
    for a in range(1, 4):                                          # kh = 2a
        lhs = xe_ref[a * Wo:(a + R) * Wo, :]
        acc_ref[...] += jnp.dot(lhs, we_ref[a],
                                preferred_element_type=jnp.float32)
    for a in range(3):                                             # kh = 2a+1
        lhs = xo_ref[a * Wo:(a + R) * Wo, :]
        acc_ref[...] += jnp.dot(lhs, wo_ref[a],
                                preferred_element_type=jnp.float32)

    # ---- BatchNorm (inference affine) + ReLU, f32 epilogue -----------------
    y = acc_ref[...] * scale_ref[...] + shift_ref[...]
    y = jnp.maximum(y, 0.0).reshape(R, Wo, C)

    # Conv rows that fall outside the real image (the pool's padding rows at
    # the top/bottom, or the tail band padding) must not contribute to the
    # max: zero them (safe: every real value is >= 0 after ReLU and every
    # pool window contains at least one real row).
    b = pl.program_id(1)
    g0 = 2 * b * TP - 1                       # global conv row of local row 0
    row = jax.lax.broadcasted_iota(jnp.int32, (R, Wo, C), 0) + g0
    y = jnp.where((row >= 0) & (row < Ho), y, 0.0)

    # ---- fused 3x3/s2/p1 max-pool ------------------------------------------
    # Stage the rows in a width-padded VMEM scratch (pad value 0 is safe
    # post-ReLU), then take the three column taps with strided loads.
    yscr_ref[...] = jnp.zeros(yscr_ref.shape, yscr_ref.dtype)
    yscr_ref[:, 1:Wo + 1, :] = y
    t0 = yscr_ref[:, pl.ds(0, Qo, 2), :]      # conv cols 2q-1
    t1 = yscr_ref[:, pl.ds(1, Qo, 2), :]      # conv cols 2q
    t2 = yscr_ref[:, pl.ds(2, Qo, 2), :]      # conv cols 2q+1
    mw = jnp.maximum(jnp.maximum(t0, t1), t2)            # (R, Qo, C)

    # Max over window rows {2q, 2q+1, 2q+2} via two pair-reductions
    # (contiguous slices + leading-dim reshape only -- no strided slicing).
    pa = jnp.max(mw[0:2 * TP].reshape(TP, 2, Qo, C), axis=1)      # rows 2q,2q+1
    pb = jnp.max(mw[1:2 * TP + 1].reshape(TP, 2, Qo, C), axis=1)  # rows 2q+1,2q+2
    o_ref[...] = jnp.maximum(pa, pb)


# --------------------------------------------------------------------------
# Glue (plain JAX, ~1x traffic): pad, width-unroll, even/odd rows, band slabs
# --------------------------------------------------------------------------
def _extract_bands(xa, NB, TP, RE):
    """Band b needs rows [2*b*TP - 1, 2*b*TP - 1 + RE) of xa (OOB rows -> 0)."""
    Nb, Ht, Wb, Kb = xa.shape
    pad_top = 1
    total_needed = 2 * (NB - 1) * TP + RE
    pad_bot = max(0, total_needed - (Ht + pad_top))
    xpd = jnp.pad(xa, ((0, 0), (pad_top, pad_bot), (0, 0), (0, 0)))
    slabs = [xpd[:, 2 * b * TP:2 * b * TP + RE] for b in range(NB)]
    return jnp.stack(slabs, axis=1)            # (N, NB, RE, Wb, Kb)


# --------------------------------------------------------------------------
# Public wrapper — ResStemIN.forward (NCHW in / NCHW out)
# --------------------------------------------------------------------------
def res_stem_in(x_nchw, conv_w, gamma, beta, run_mean, run_var,
                eps=BN_EPS, tp_target=16):
    N, C_in, H, W = x_nchw.shape
    C_out = conv_w.shape[0]
    KC = 7 * C_in

    # Geometry: conv 7/2/3 then pool 3/2/1.
    Ho = (H - 1) // 2 + 1
    Wo = (W - 1) // 2 + 1
    Po = (Ho - 1) // 2 + 1
    Qo = (Wo - 1) // 2 + 1

    TP = min(Po, tp_target)                    # pooled rows per grid step
    NB = (Po + TP - 1) // TP                   # number of row bands (cdiv)
    Po_pad = NB * TP                           # padded pool rows (tail masked)
    R = 2 * TP + 1                             # conv rows per band
    RE = 2 * TP + 4                            # even/odd input rows per band

    # NCHW -> NHWC, spatial zero pad of 3, bf16 for the MXU.
    x = jnp.transpose(x_nchw, (0, 2, 3, 1))
    xp = jnp.pad(x, ((0, 0), (3, 3), (3, 3), (0, 0))).astype(jnp.bfloat16)
    Hp = H + 6

    # Width-direction unroll only: xw[n,h,ow,kw*Cin+ci] = xp[n,h,2*ow+kw,ci].
    # (~3.5x of the small input, in bf16 -- replaces the 12x f32 full im2col.)
    cols = [xp[:, :, kw:kw + 2 * Wo:2, :] for kw in range(7)]
    xw = jnp.stack(cols, axis=3).reshape(N, Hp, Wo, KC)

    # Even / odd input rows so the kernel's 7 shifted matmuls use contiguous
    # row slices (conv row oh = sum_a xwe[oh+a]@We[a] + sum_a xwo[oh+a]@Wo[a]).
    xwe = xw[:, 0::2]
    xwo = xw[:, 1::2]

    # Per-band slabs (includes the small halo duplication) and flatten rows so
    # the kernel's matmul LHS is a plain contiguous 2D slice.
    xe_b = _extract_bands(xwe, NB, TP, RE).reshape(N, NB, RE * Wo, KC)
    xo_b = _extract_bands(xwo, NB, TP, RE).reshape(N, NB, RE * Wo, KC)

    # Conv weight (O, I, kh, kw) -> (kh, kw*Cin, Cout), split even/odd kh, bf16.
    w_k = jnp.transpose(conv_w, (2, 3, 1, 0)).reshape(7, KC, C_out)
    w_k = w_k.astype(jnp.bfloat16)
    we_mat = w_k[0::2]                          # kh = 0,2,4,6 -> (4, KC, Cout)
    wo_mat = w_k[1::2]                          # kh = 1,3,5   -> (3, KC, Cout)

    s = gamma / jnp.sqrt(run_var + eps)
    scale = s.reshape(1, C_out).astype(jnp.float32)
    shift = (beta - run_mean * s).reshape(1, C_out).astype(jnp.float32)

    # Explicit VMEM budget (review: re-budget for v7x's smaller scoped VMEM).
    est = (2 * 2 * (RE * Wo * KC * 2)                     # xe+xo, double-buffered
           + 2 * (7 * KC * C_out * 2 + 2 * C_out * 4)     # weights + scale/shift
           + 2 * (TP * Qo * C_out * 4)                    # output block
           + (R * Wo * C_out + R * (2 * Qo + 1) * C_out) * 4)   # scratches
    vmem_limit = int(min(100 * 2 ** 20, max(32 * 2 ** 20, 2 * est)))

    kernel = functools.partial(_stem_kernel, TP=TP, Ho=Ho, Wo=Wo, Qo=Qo)

    out_padded = pl.pallas_call(
        kernel,
        out_shape=jax.ShapeDtypeStruct((N, Po_pad, Qo, C_out), jnp.float32),
        grid_spec=pltpu.PrefetchScalarGridSpec(
            num_scalar_prefetch=0,
            grid=(N, NB),
            in_specs=[
                pl.BlockSpec((None, None, RE * Wo, KC),
                             lambda n, b: (n, b, 0, 0)),
                pl.BlockSpec((None, None, RE * Wo, KC),
                             lambda n, b: (n, b, 0, 0)),
                pl.BlockSpec((4, KC, C_out), lambda n, b: (0, 0, 0)),
                pl.BlockSpec((3, KC, C_out), lambda n, b: (0, 0, 0)),
                pl.BlockSpec((1, C_out), lambda n, b: (0, 0)),
                pl.BlockSpec((1, C_out), lambda n, b: (0, 0)),
            ],
            out_specs=pl.BlockSpec((None, TP, Qo, C_out),
                                   lambda n, b: (n, b, 0, 0)),
            scratch_shapes=[
                pltpu.VMEM((R * Wo, C_out), jnp.float32),          # conv acc
                pltpu.VMEM((R, 2 * Qo + 1, C_out), jnp.float32),   # pool stage
            ],
        ),
        compiler_params=pltpu.CompilerParams(
            dimension_semantics=("parallel", "parallel"),
            vmem_limit_bytes=vmem_limit,
        ),
    )(xe_b, xo_b, we_mat, wo_mat, scale, shift)

    out = out_padded[:, :Po]                    # drop the padded tail pool rows
    return jnp.transpose(out, (0, 3, 1, 2))     # NHWC-pooled -> NCHW


# --------------------------------------------------------------------------
# Pure-JAX reference (for correctness check only)
# --------------------------------------------------------------------------
def _reference(x, w, gamma, beta, rmean, rvar, eps=BN_EPS):
    y = jax.lax.conv_general_dilated(
        x, w, window_strides=(2, 2), padding=((3, 3), (3, 3)),
        dimension_numbers=("NCHW", "OIHW", "NCHW"))
    s = gamma / jnp.sqrt(rvar + eps)
    y = y * s[None, :, None, None] + (beta - rmean * s)[None, :, None, None]
    y = jnp.maximum(y, 0.0)
    y = jax.lax.reduce_window(
        y, -jnp.inf, jax.lax.max,
        window_dimensions=(1, 1, 3, 3), window_strides=(1, 1, 2, 2),
        padding=((0, 0), (0, 0), (1, 1), (1, 1)))
    return y


# --------------------------------------------------------------------------
if __name__ == "__main__":
    # Small, deterministic synthetic setup: w_in=4, w_out=32, 16x16 input.
    N, w_in, w_out, H, W = 2, 4, 32, 16, 16

    key = jax.random.PRNGKey(0)
    k_x, k_w, k_g, k_b, k_m, k_v = jax.random.split(key, 6)

    x = jax.random.normal(k_x, (N, w_in, H, W), dtype=jnp.float32)
    conv_w = 0.1 * jax.random.normal(k_w, (w_out, w_in, 7, 7), dtype=jnp.float32)
    gamma = 1.0 + 0.1 * jax.random.normal(k_g, (w_out,), dtype=jnp.float32)
    beta = 0.05 * jax.random.normal(k_b, (w_out,), dtype=jnp.float32)
    run_mean = 0.1 * jax.random.normal(k_m, (w_out,), dtype=jnp.float32)
    run_var = 1.0 + 0.1 * jnp.abs(jax.random.normal(k_v, (w_out,), dtype=jnp.float32))

    out = res_stem_in(x, conv_w, gamma, beta, run_mean, run_var)
    out = jax.block_until_ready(out)

    ref = jax.block_until_ready(
        _reference(x, conv_w, gamma, beta, run_mean, run_var))

    assert out.shape == ref.shape == (N, w_out, 4, 4), (out.shape, ref.shape)
    # Tolerance sized for the bf16 matmul inputs (f32 accumulation).
    max_err = float(jnp.max(jnp.abs(out - ref)))
    assert max_err < 5e-2, f"max abs err too large: {max_err}"

    print("KERNEL_OK")
</pallas_src>

<mosaic_0001>
module attributes {stable_mosaic.version = 11 : i64} {
  func.func @_stem_kernel(%arg0: i32, %arg1: i32, %arg2: memref<1x1x96x28xbf16, #tpu.memory_space<vmem>>, %arg3: memref<1x1x96x28xbf16, #tpu.memory_space<vmem>>, %arg4: memref<4x28x32xbf16, #tpu.memory_space<vmem>>, %arg5: memref<3x28x32xbf16, #tpu.memory_space<vmem>>, %arg6: memref<1x32xf32, #tpu.memory_space<vmem>>, %arg7: memref<1x32xf32, #tpu.memory_space<vmem>>, %arg8: memref<1x4x4x32xf32, #tpu.memory_space<vmem>>, %arg9: memref<72x32xf32, #tpu.memory_space<vmem>>, %arg10: memref<9x9x32xf32, #tpu.memory_space<vmem>>) attributes {dimension_semantics = [#tpu.dimension_semantics<parallel>, #tpu.dimension_semantics<parallel>], iteration_bounds = array<i64: 2, 1>, scalar_prefetch = 0 : i64, scratch_operands = 2 : i64, tpu.core_type = #tpu.core_type<tc>, window_params = [{transform_indices = @transform_0, window_bounds = array<i64: 1, 1, 96, 28>}, {transform_indices = @transform_1, window_bounds = array<i64: 1, 1, 96, 28>}, {pipeline_mode = #tpu.pipeline_mode<synchronous>, transform_indices = @transform_2, window_bounds = array<i64: 4, 28, 32>}, {pipeline_mode = #tpu.pipeline_mode<synchronous>, transform_indices = @transform_3, window_bounds = array<i64: 3, 28, 32>}, {pipeline_mode = #tpu.pipeline_mode<synchronous>, transform_indices = @transform_4, window_bounds = array<i64: 1, 32>}, {pipeline_mode = #tpu.pipeline_mode<synchronous>, transform_indices = @transform_5, window_bounds = array<i64: 1, 32>}, {transform_indices = @transform_6, window_bounds = array<i64: 1, 4, 4, 32>}]} {
    %c0 = arith.constant 0 : index
    %c0_0 = arith.constant 0 : index
    %c0_1 = arith.constant 0 : index
    %c0_2 = arith.constant 0 : index
    %0 = vector.load %arg2[%c0, %c0_0, %c0_1, %c0_2] : memref<1x1x96x28xbf16, #tpu.memory_space<vmem>>, vector<1x1x72x28xbf16>
    %1 = vector.shape_cast %0 : vector<1x1x72x28xbf16> to vector<72x28xbf16>
    %c0_3 = arith.constant 0 : index
    %c0_4 = arith.constant 0 : index
    %c0_5 = arith.constant 0 : index
    %2 = vector.load %arg4[%c0_3, %c0_4, %c0_5] : memref<4x28x32xbf16, #tpu.memory_space<vmem>>, vector<1x28x32xbf16>
    %3 = vector.shape_cast %2 : vector<1x28x32xbf16> to vector<28x32xbf16>
    %cst = arith.constant dense<0.000000e+00> : vector<72x32xf32>
    %4 = tpu.matmul %1, %3, %cst {dimension_numbers = #tpu.dot_dimension_numbers<[1], [0], [0], [1], [0, 0, 1, 1], [], []>} : vector<72x28xbf16>, vector<28x32xbf16>, vector<72x32xf32> -> vector<72x32xf32>
    %c0_6 = arith.constant 0 : index
    %c0_7 = arith.constant 0 : index
    %5 = vector.load %arg9[%c0_6, %c0_7] : memref<72x32xf32, #tpu.memory_space<vmem>>, vector<72x32xf32>
    tpu.vector_store %arg9[%c0_6, %c0_7], %4 {strides = array<i32>} : memref<72x32xf32, #tpu.memory_space<vmem>>, vector<72x32xf32>,
    %c0_8 = arith.constant 0 : index
    %c0_9 = arith.constant 0 : index
    %c8 = arith.constant 8 : index
    %c0_10 = arith.constant 0 : index
    %6 = vector.load %arg2[%c0_8, %c0_9, %c8, %c0_10] : memref<1x1x96x28xbf16, #tpu.memory_space<vmem>>, vector<1x1x72x28xbf16>
    %7 = vector.shape_cast %6 : vector<1x1x72x28xbf16> to vector<72x28xbf16>
    %c0_11 = arith.constant 0 : index
    %c0_12 = arith.constant 0 : index
    %8 = vector.load %arg9[%c0_11, %c0_12] : memref<72x32xf32, #tpu.memory_space<vmem>>, vector<72x32xf32>
    %c1 = arith.constant 1 : index
    %c0_13 = arith.constant 0 : index
    %c0_14 = arith.constant 0 : index
    %9 = vector.load %arg4[%c1, %c0_13, %c0_14] : memref<4x28x32xbf16, #tpu.memory_space<vmem>>, vector<1x28x32xbf16>
    %10 = vector.shape_cast %9 : vector<1x28x32xbf16> to vector<28x32xbf16>
    %cst_15 = arith.constant dense<0.000000e+00> : vector<72x32xf32>
    %11 = tpu.matmul %7, %10, %cst_15 {dimension_numbers = #tpu.dot_dimension_numbers<[1], [0], [0], [1], [0, 0, 1, 1], [], []>} : vector<72x28xbf16>, vector<28x32xbf16>, vector<72x32xf32> -> vector<72x32xf32>
    %12 = arith.addf %8, %11 : vector<72x32xf32>
    %c0_16 = arith.constant 0 : index
    %c0_17 = arith.constant 0 : index
    %13 = vector.load %arg9[%c0_16, %c0_17] : memref<72x32xf32, #tpu.memory_space<vmem>>, vector<72x32xf32>
    tpu.vector_store %arg9[%c0_16, %c0_17], %12 {strides = array<i32>} : memref<72x32xf32, #tpu.memory_space<vmem>>, vector<72x32xf32>,
    %c0_18 = arith.constant 0 : index
    %c0_19 = arith.constant 0 : index
    %c16 = arith.constant 16 : index
    %c0_20 = arith.constant 0 : index
    %14 = vector.load %arg2[%c0_18, %c0_19, %c16, %c0_20] : memref<1x1x96x28xbf16, #tpu.memory_space<vmem>>, vector<1x1x72x28xbf16>
    %15 = vector.shape_cast %14 : vector<1x1x72x28xbf16> to vector<72x28xbf16>
    %c0_21 = arith.constant 0 : index
    %c0_22 = arith.constant 0 : index
    %16 = vector.load %arg9[%c0_21, %c0_22] : memref<72x32xf32, #tpu.memory_space<vmem>>, vector<72x32xf32>
    %c2 = arith.constant 2 : index
    %c0_23 = arith.constant 0 : index
    %c0_24 = arith.constant 0 : index
    %17 = vector.load %arg4[%c2, %c0_23, %c0_24] : memref<4x28x32xbf16, #tpu.memory_space<vmem>>, vector<1x28x32xbf16>
    %18 = vector.shape_cast %17 : vector<1x28x32xbf16> to vector<28x32xbf16>
    %cst_25 = arith.constant dense<0.000000e+00> : vector<72x32xf32>
    %19 = tpu.matmul %15, %18, %cst_25 {dimension_numbers = #tpu.dot_dimension_numbers<[1], [0], [0], [1], [0, 0, 1, 1], [], []>} : vector<72x28xbf16>, vector<28x32xbf16>, vector<72x32xf32> -> vector<72x32xf32>
    %20 = arith.addf %16, %19 : vector<72x32xf32>
    %c0_26 = arith.constant 0 : index
    %c0_27 = arith.constant 0 : index
    %21 = vector.load %arg9[%c0_26, %c0_27] : memref<72x32xf32, #tpu.memory_space<vmem>>, vector<72x32xf32>
    tpu.vector_store %arg9[%c0_26, %c0_27], %20 {strides = array<i32>} : memref<72x32xf32, #tpu.memory_space<vmem>>, vector<72x32xf32>,
    %c0_28 = arith.constant 0 : index
    %c0_29 = arith.constant 0 : index
    %c24 = arith.constant 24 : index
    %c0_30 = arith.constant 0 : index
    %22 = vector.load %arg2[%c0_28, %c0_29, %c24, %c0_30] : memref<1x1x96x28xbf16, #tpu.memory_space<vmem>>, vector<1x1x72x28xbf16>
    %23 = vector.shape_cast %22 : vector<1x1x72x28xbf16> to vector<72x28xbf16>
    %c0_31 = arith.constant 0 : index
    %c0_32 = arith.constant 0 : index
    %24 = vector.load %arg9[%c0_31, %c0_32] : memref<72x32xf32, #tpu.memory_space<vmem>>, vector<72x32xf32>
    %c3 = arith.constant 3 : index
    %c0_33 = arith.constant 0 : index
    %c0_34 = arith.constant 0 : index
    %25 = vector.load %arg4[%c3, %c0_33, %c0_34] : memref<4x28x32xbf16, #tpu.memory_space<vmem>>, vector<1x28x32xbf16>
    %26 = vector.shape_cast %25 : vector<1x28x32xbf16> to vector<28x32xbf16>
    %cst_35 = arith.constant dense<0.000000e+00> : vector<72x32xf32>
    %27 = tpu.matmul %23, %26, %cst_35 {dimension_numbers = #tpu.dot_dimension_numbers<[1], [0], [0], [1], [0, 0, 1, 1], [], []>} : vector<72x28xbf16>, vector<28x32xbf16>, vector<72x32xf32> -> vector<72x32xf32>
    %28 = arith.addf %24, %27 : vector<72x32xf32>
    %c0_36 = arith.constant 0 : index
    %c0_37 = arith.constant 0 : index
    %29 = vector.load %arg9[%c0_36, %c0_37] : memref<72x32xf32, #tpu.memory_space<vmem>>, vector<72x32xf32>
    tpu.vector_store %arg9[%c0_36, %c0_37], %28 {strides = array<i32>} : memref<72x32xf32, #tpu.memory_space<vmem>>, vector<72x32xf32>,
    %c0_38 = arith.constant 0 : index
    %c0_39 = arith.constant 0 : index
    %c0_40 = arith.constant 0 : index
    %c0_41 = arith.constant 0 : index
    %30 = vector.load %arg3[%c0_38, %c0_39, %c0_40, %c0_41] : memref<1x1x96x28xbf16, #tpu.memory_space<vmem>>, vector<1x1x72x28xbf16>
    %31 = vector.shape_cast %30 : vector<1x1x72x28xbf16> to vector<72x28xbf16>
    %c0_42 = arith.constant 0 : index
    %c0_43 = arith.constant 0 : index
    %32 = vector.load %arg9[%c0_42, %c0_43] : memref<72x32xf32, #tpu.memory_space<vmem>>, vector<72x32xf32>
    %c0_44 = arith.constant 0 : index
    %c0_45 = arith.constant 0 : index
    %c0_46 = arith.constant 0 : index
    %33 = vector.load %arg5[%c0_44, %c0_45, %c0_46] : memref<3x28x32xbf16, #tpu.memory_space<vmem>>, vector<1x28x32xbf16>
    %34 = vector.shape_cast %33 : vector<1x28x32xbf16> to vector<28x32xbf16>
    %cst_47 = arith.constant dense<0.000000e+00> : vector<72x32xf32>
    %35 = tpu.matmul %31, %34, %cst_47 {dimension_numbers = #tpu.dot_dimension_numbers<[1], [0], [0], [1], [0, 0, 1, 1], [], []>} : vector<72x28xbf16>, vector<28x32xbf16>, vector<72x32xf32> -> vector<72x32xf32>
    %36 = arith.addf %32, %35 : vector<72x32xf32>
    %c0_48 = arith.constant 0 : index
    %c0_49 = arith.constant 0 : index
    %37 = vector.load %arg9[%c0_48, %c0_49] : memref<72x32xf32, #tpu.memory_space<vmem>>, vector<72x32xf32>
    tpu.vector_store %arg9[%c0_48, %c0_49], %36 {strides = array<i32>} : memref<72x32xf32, #tpu.memory_space<vmem>>, vector<72x32xf32>,
    %c0_50 = arith.constant 0 : index
    %c0_51 = arith.constant 0 : index
    %c8_52 = arith.constant 8 : index
    %c0_53 = arith.constant 0 : index
    %38 = vector.load %arg3[%c0_50, %c0_51, %c8_52, %c0_53] : memref<1x1x96x28xbf16, #tpu.memory_space<vmem>>, vector<1x1x72x28xbf16>
    %39 = vector.shape_cast %38 : vector<1x1x72x28xbf16> to vector<72x28xbf16>
    %c0_54 = arith.constant 0 : index
    %c0_55 = arith.constant 0 : index
    %40 = vector.load %arg9[%c0_54, %c0_55] : memref<72x32xf32, #tpu.memory_space<vmem>>, vector<72x32xf32>
    %c1_56 = arith.constant 1 : index
    %c0_57 = arith.constant 0 : index
    %c0_58 = arith.constant 0 : index
    %41 = vector.load %arg5[%c1_56, %c0_57, %c0_58] : memref<3x28x32xbf16, #tpu.memory_space<vmem>>, vector<1x28x32xbf16>
    %42 = vector.shape_cast %41 : vector<1x28x32xbf16> to vector<28x32xbf16>
    %cst_59 = arith.constant dense<0.000000e+00> : vector<72x32xf32>
    %43 = tpu.matmul %39, %42, %cst_59 {dimension_numbers = #tpu.dot_dimension_numbers<[1], [0], [0], [1], [0, 0, 1, 1], [], []>} : vector<72x28xbf16>, vector<28x32xbf16>, vector<72x32xf32> -> vector<72x32xf32>
    %44 = arith.addf %40, %43 : vector<72x32xf32>
    %c0_60 = arith.constant 0 : index
    %c0_61 = arith.constant 0 : index
    %45 = vector.load %arg9[%c0_60, %c0_61] : memref<72x32xf32, #tpu.memory_space<vmem>>, vector<72x32xf32>
    tpu.vector_store %arg9[%c0_60, %c0_61], %44 {strides = array<i32>} : memref<72x32xf32, #tpu.memory_space<vmem>>, vector<72x32xf32>,
    %c0_62 = arith.constant 0 : index
    %c0_63 = arith.constant 0 : index
    %c16_64 = arith.constant 16 : index
    %c0_65 = arith.constant 0 : index
    %46 = vector.load %arg3[%c0_62, %c0_63, %c16_64, %c0_65] : memref<1x1x96x28xbf16, #tpu.memory_space<vmem>>, vector<1x1x72x28xbf16>
    %47 = vector.shape_cast %46 : vector<1x1x72x28xbf16> to vector<72x28xbf16>
    %c0_66 = arith.constant 0 : index
    %c0_67 = arith.constant 0 : index
    %48 = vector.load %arg9[%c0_66, %c0_67] : memref<72x32xf32, #tpu.memory_space<vmem>>, vector<72x32xf32>
    %c2_68 = arith.constant 2 : index
    %c0_69 = arith.constant 0 : index
    %c0_70 = arith.constant 0 : index
    %49 = vector.load %arg5[%c2_68, %c0_69, %c0_70] : memref<3x28x32xbf16, #tpu.memory_space<vmem>>, vector<1x28x32xbf16>
    %50 = vector.shape_cast %49 : vector<1x28x32xbf16> to vector<28x32xbf16>
    %cst_71 = arith.constant dense<0.000000e+00> : vector<72x32xf32>
    %51 = tpu.matmul %47, %50, %cst_71 {dimension_numbers = #tpu.dot_dimension_numbers<[1], [0], [0], [1], [0, 0, 1, 1], [], []>} : vector<72x28xbf16>, vector<28x32xbf16>, vector<72x32xf32> -> vector<72x32xf32>
    %52 = arith.addf %48, %51 : vector<72x32xf32>
    %c0_72 = arith.constant 0 : index
    %c0_73 = arith.constant 0 : index
    %53 = vector.load %arg9[%c0_72, %c0_73] : memref<72x32xf32, #tpu.memory_space<vmem>>, vector<72x32xf32>
    tpu.vector_store %arg9[%c0_72, %c0_73], %52 {strides = array<i32>} : memref<72x32xf32, #tpu.memory_space<vmem>>, vector<72x32xf32>,
    %c0_74 = arith.constant 0 : index
    %c0_75 = arith.constant 0 : index
    %54 = vector.load %arg9[%c0_74, %c0_75] : memref<72x32xf32, #tpu.memory_space<vmem>>, vector<72x32xf32>
    %c0_76 = arith.constant 0 : index
    %c0_77 = arith.constant 0 : index
    %55 = vector.load %arg6[%c0_76, %c0_77] : memref<1x32xf32, #tpu.memory_space<vmem>>, vector<1x32xf32>
    %56 = vector.broadcast %55 : vector<1x32xf32> to vector<72x32xf32>
    %57 = arith.mulf %54, %56 : vector<72x32xf32>
    %c0_78 = arith.constant 0 : index
    %c0_79 = arith.constant 0 : index
    %58 = vector.load %arg7[%c0_78, %c0_79] : memref<1x32xf32, #tpu.memory_space<vmem>>, vector<1x32xf32>
    %59 = vector.broadcast %58 : vector<1x32xf32> to vector<72x32xf32>
    %60 = arith.addf %57, %59 : vector<72x32xf32>
    %cst_80 = arith.constant 0.000000e+00 : f32
    %61 = vector.broadcast %cst_80 : f32 to vector<72x32xf32>
    %62 = arith.maximumf %60, %61 : vector<72x32xf32>
    %63 = vector.shape_cast %62 : vector<72x32xf32> to vector<9x8x32xf32>
    %c2_i32 = arith.constant 2 : i32
    %64 = arith.muli %c2_i32, %arg1 : i32
    %c4_i32 = arith.constant 4 : i32
    %65 = arith.muli %64, %c4_i32 : i32
    %c1_i32 = arith.constant 1 : i32
    %66 = arith.subi %65, %c1_i32 : i32
    %67 = tpu.iota {dimensions = array<i32: 0>} : vector<9x8x32xi32>
    %68 = vector.broadcast %66 : i32 to vector<9x8x32xi32>
    %69 = arith.addi %67, %68 : vector<9x8x32xi32>
    %c0_i32 = arith.constant 0 : i32
    %70 = vector.broadcast %c0_i32 : i32 to vector<9x8x32xi32>
    %71 = arith.cmpi sge, %69, %70 : vector<9x8x32xi32>
    %c8_i32 = arith.constant 8 : i32
    %72 = vector.broadcast %c8_i32 : i32 to vector<9x8x32xi32>
    %73 = arith.cmpi slt, %69, %72 : vector<9x8x32xi32>
    %74 = arith.andi %71, %73 : vector<9x8x32xi1>
    %cst_81 = arith.constant 0.000000e+00 : f32
    %75 = vector.broadcast %cst_81 : f32 to vector<9x8x32xf32>
    %76 = arith.select %74, %63, %75 : vector<9x8x32xi1>, vector<9x8x32xf32>
    %cst_82 = arith.constant 0.000000e+00 : f32
    %77 = vector.broadcast %cst_82 : f32 to vector<9x9x32xf32>
    %c0_83 = arith.constant 0 : index
    %c0_84 = arith.constant 0 : index
    %c0_85 = arith.constant 0 : index
    %78 = vector.load %arg10[%c0_83, %c0_84, %c0_85] : memref<9x9x32xf32, #tpu.memory_space<vmem>>, vector<9x9x32xf32>
    tpu.vector_store %arg10[%c0_83, %c0_84, %c0_85], %77 {strides = array<i32>} : memref<9x9x32xf32, #tpu.memory_space<vmem>>, vector<9x9x32xf32>,
    %c0_86 = arith.constant 0 : index
    %c1_87 = arith.constant 1 : index
    %c0_88 = arith.constant 0 : index
    %79 = vector.load %arg10[%c0_86, %c1_87, %c0_88] : memref<9x9x32xf32, #tpu.memory_space<vmem>>, vector<9x8x32xf32>
    tpu.vector_store %arg10[%c0_86, %c1_87, %c0_88], %76 {strides = array<i32>} : memref<9x9x32xf32, #tpu.memory_space<vmem>>, vector<9x8x32xf32>,
    %c0_89 = arith.constant 0 : index
    %c0_90 = arith.constant 0 : index
    %c0_91 = arith.constant 0 : index
    %80 = tpu.strided_load %arg10[%c0_89, %c0_90, %c0_91] {strides = array<i32: 1, 2, 1>} : memref<9x9x32xf32, #tpu.memory_space<vmem>>, vector<9x4x32xf32>
    %c0_92 = arith.constant 0 : index
    %c1_93 = arith.constant 1 : index
    %c0_94 = arith.constant 0 : index
    %81 = tpu.strided_load %arg10[%c0_92, %c1_93, %c0_94] {strides = array<i32: 1, 2, 1>} : memref<9x9x32xf32, #tpu.memory_space<vmem>>, vector<9x4x32xf32>
    %c0_95 = arith.constant 0 : index
    %c2_96 = arith.constant 2 : index
    %c0_97 = arith.constant 0 : index
    %82 = tpu.strided_load %arg10[%c0_95, %c2_96, %c0_97] {strides = array<i32: 1, 2, 1>} : memref<9x9x32xf32, #tpu.memory_space<vmem>>, vector<9x4x32xf32>
    %83 = arith.maximumf %80, %81 : vector<9x4x32xf32>
    %84 = arith.maximumf %83, %82 : vector<9x4x32xf32>
    %85 = vector.extract_strided_slice %84 {offsets = [0, 0, 0], sizes = [8, 4, 32], strides = [1, 1, 1]} : vector<9x4x32xf32> to vector<8x4x32xf32>
    %86 = vector.shape_cast %85 : vector<8x4x32xf32> to vector<4x2x4x32xf32>
    %cst_98 = arith.constant dense<0xFF800000> : vector<4x4x32xf32>
    %87 = vector.multi_reduction <maximumf>, %86, %cst_98 [1] : vector<4x2x4x32xf32> to vector<4x4x32xf32>
    %88 = vector.extract_strided_slice %84 {offsets = [1, 0, 0], sizes = [8, 4, 32], strides = [1, 1, 1]} : vector<9x4x32xf32> to vector<8x4x32xf32>
    %89 = vector.shape_cast %88 : vector<8x4x32xf32> to vector<4x2x4x32xf32>
    %cst_99 = arith.constant dense<0xFF800000> : vector<4x4x32xf32>
    %90 = vector.multi_reduction <maximumf>, %89, %cst_99 [1] : vector<4x2x4x32xf32> to vector<4x4x32xf32>
    %91 = arith.maximumf %87, %90 : vector<4x4x32xf32>
    %c0_100 = arith.constant 0 : index
    %c0_101 = arith.constant 0 : index
    %c0_102 = arith.constant 0 : index
    %c0_103 = arith.constant 0 : index
    %92 = vector.load %arg8[%c0_100, %c0_101, %c0_102, %c0_103] : memref<1x4x4x32xf32, #tpu.memory_space<vmem>>, vector<1x4x4x32xf32>
    %93 = vector.shape_cast %92 : vector<1x4x4x32xf32> to vector<4x4x32xf32>
    %94 = vector.shape_cast %91 : vector<4x4x32xf32> to vector<1x4x4x32xf32>
    tpu.vector_store %arg8[%c0_100, %c0_101, %c0_102, %c0_103], %94 {strides = array<i32>} : memref<1x4x4x32xf32, #tpu.memory_space<vmem>>, vector<1x4x4x32xf32>,
    return
  }
  func.func @transform_0(%arg0: i32, %arg1: i32) -> (i32, i32, i32, i32) {
    %c0_i32 = arith.constant 0 : i32
    %c0_i32_0 = arith.constant 0 : i32
    %c0_i32_1 = arith.constant 0 : i32
    return %arg0, %arg1, %c0_i32, %c0_i32_0 : i32, i32, i32, i32
  }
  func.func @transform_1(%arg0: i32, %arg1: i32) -> (i32, i32, i32, i32) {
    %c0_i32 = arith.constant 0 : i32
    %c0_i32_0 = arith.constant 0 : i32
    %c0_i32_1 = arith.constant 0 : i32
    return %arg0, %arg1, %c0_i32, %c0_i32_0 : i32, i32, i32, i32
  }
  func.func @transform_2(%arg0: i32, %arg1: i32) -> (i32, i32, i32) {
    %c0_i32 = arith.constant 0 : i32
    %c0_i32_0 = arith.constant 0 : i32
    %c0_i32_1 = arith.constant 0 : i32
    %c0_i32_2 = arith.constant 0 : i32
    return %c0_i32, %c0_i32_0, %c0_i32_1 : i32, i32, i32
  }
  func.func @transform_3(%arg0: i32, %arg1: i32) -> (i32, i32, i32) {
    %c0_i32 = arith.constant 0 : i32
    %c0_i32_0 = arith.constant 0 : i32
    %c0_i32_1 = arith.constant 0 : i32
    %c0_i32_2 = arith.constant 0 : i32
    return %c0_i32, %c0_i32_0, %c0_i32_1 : i32, i32, i32
  }
  func.func @transform_4(%arg0: i32, %arg1: i32) -> (i32, i32) {
    %c0_i32 = arith.constant 0 : i32
    %c0_i32_0 = arith.constant 0 : i32
    %c0_i32_1 = arith.constant 0 : i32
    return %c0_i32, %c0_i32_0 : i32, i32
  }
  func.func @transform_5(%arg0: i32, %arg1: i32) -> (i32, i32) {
    %c0_i32 = arith.constant 0 : i32
    %c0_i32_0 = arith.constant 0 : i32
    %c0_i32_1 = arith.constant 0 : i32
    return %c0_i32, %c0_i32_0 : i32, i32
  }
  func.func @transform_6(%arg0: i32, %arg1: i32) -> (i32, i32, i32, i32) {
    %c0_i32 = arith.constant 0 : i32
    %c0_i32_0 = arith.constant 0 : i32
    %c0_i32_1 = arith.constant 0 : i32
    return %arg0, %arg1, %c0_i32, %c0_i32_0 : i32, i32, i32, i32
  }
}

</mosaic_0001>

<llo_original>
// kernel: tpu_custom_call.1
$region0: #{tpu_custom_call.1}
  #allocation0 [shape = 'u32[]', space=smem, size = 0x4, offset = 0x4, fixed_abs, tag = 'smem constant byte address 0x4 - core index']
  #allocation1 [shape = 'u32[144,128]{1,0:T(1,128)}', space=vmem, size = 0x12000, scoped, tag = 'internal scratch']
  #allocation2 [shape = 'f32[72,32]{1,0:T(8,128)}', space=vmem, size = 0x9000, scoped, tag = 'scratch operand']
  #allocation3 [shape = 'f32[9,9,32]{2,1,0:T(8,128)}', space=vmem, size = 0x12000, scoped, tag = 'scratch operand']
  %s0 = inlined_call_operand.vmem [shape: bf16[2,1,96,28], index: 0, kind: input, shape index: {}]
  %s1 = inlined_call_operand.vmem [shape: bf16[2,1,96,28], index: 1, kind: input, shape index: {}]
  %s2 = inlined_call_operand.vmem [shape: bf16[4,28,32], index: 2, kind: input, shape index: {}]
  %s3 = inlined_call_operand.vmem [shape: bf16[3,28,32], index: 3, kind: input, shape index: {}]
  %s4 = inlined_call_operand.vmem [shape: f32[1,32], index: 4, kind: input, shape index: {}]
  %s5 = inlined_call_operand.vmem [shape: f32[1,32], index: 5, kind: input, shape index: {}]
  %s6 = inlined_call_operand.hbm [shape: f32[2,4,4,32], index: 6, kind: output, shape index: {}]
  %s7 = sld [smem:[#allocation0]]
  $region57: #{tpu_custom_call.1} parent=0
    _
  %s9 = ssub.s32 1, %s7
  %s10 = scalar_select 0, %s9, %s7
  $region1: #{tpu_custom_call.1} parent=0
    #allocation4 [shape = 'u8[16384]{0}', space=vmem, size = 0x4000, scoped, tag = 'output window, operand 0']
    #allocation5 [shape = 's32[2]{0}', space=sflag, size = 0x8, scoped, tag = 'scoped memory for tpu_custom_call.1']
    %11 = vsyncpa [#allocation5], 0
    %s12 = scalar_lea.sflag [#allocation5], 1
    %13 = vsyncpa %s12, 0
    loop: start=0, step=1, limit=4
    $region2: #{tpu_custom_call.1} parent=1 // loop_pre_header
      _
    $region3: #{tpu_custom_call.1} parent=1 // loop_header
      %s15 = sphi 0, %s19
      %p16 = scmp.ge.s32.totalorder %s15, 4
      %s22 = sphi 0, %s34
      %s23 = sphi 0, %s30
      %s24 = sphi 0, %s22
      %s25 = sphi 0, %s23
      %s26 = sphi 0, %s24
      %s27 = sphi 0, %s25
      %s39 = sphi 0, %s41
      %s42 = sphi 0, %s39
      %s43 = sphi 0, %s42
      %s59 = sphi 0, %s43
      %s67 = sphi 0, %s69
      %s70 = sphi 0, %s67
      %s71 = sphi 0, %s70
      %s87 = sphi 0, %s71
      %s91 = sphi 0, %s91
      %s93 = sphi 0, %s91
      %s94 = sphi 0, %s93
      %s108 = sphi 0, %s94
      %s112 = sphi 0, %s112
      %s114 = sphi 0, %s112
      %s115 = sphi 0, %s114
      %s129 = sphi 0, %s115
      %s133 = sphi 0, %s133
      %s135 = sphi 0, %s133
      %s136 = sphi 0, %s135
      %s150 = sphi 0, %s136
      %s154 = sphi 0, %s154
      %s156 = sphi 0, %s154
      %s157 = sphi 0, %s156
      %s171 = sphi 0, %s157
      %s179 = sphi 0, %s181
      %s182 = sphi 0, %s179
      %s183 = sphi 0, %s182
      %s199 = sphi 0, %s183
    $region4: #{tpu_custom_call.1} parent=1 // loop_header_branch
      %18 = sbr.rel (%p16) target = $region8
    $region5: #{tpu_custom_call.1} parent=1 // loop_body
      %s20 = ssub.s32 %s15, 1
      %s21 = ssub.s32 %s15, 2
      %s28 = sadd.s32 1, %s23
      %p29 = scmp.ge.s32.totalorder %s28, 1
      %s30 = scalar_select %p29, 0, %s28
      %s31 = sadd.s32 1, %s22
      %s32 = scalar_select %p29, %s31, %s22
      %p33 = scmp.ge.s32.totalorder %s32, 2
      %s34 = scalar_select %p33, 0, %s32
      %s35 = ssub.s32 %s22, %s34
      %s36 = ssub.s32 %s23, %s30
      %s37 = sor.u32 %s35, %s36
      %p38 = scmp.eq.s32.totalorder %s37, 0
      %s40 = sadd.s32 %s39, 1
      %s41 = scalar_select %p38, %s39, %s40
      %p44 = pneg %p38
      %p45 = scmp.eq.s32.totalorder %s15, 1
      %p46 = por %p44, %p45
      %p47 = scmp.ne.s32.totalorder %s39, %s42
      %p48 = scmp.eq.s32.totalorder %s15, 0
      %p49 = por %p47, %p48
      %p50 = scmp.ne.s32.totalorder %s39, %s42
      %p51 = scmp.eq.s32.totalorder %s20, 1
      %p52 = por %p50, %p51
      %p53 = scmp.ne.s32.totalorder %s42, %s43
      %p54 = scmp.eq.s32.totalorder %s20, 0
      %p55 = por %p53, %p54
      %p56 = scmp.ne.s32.totalorder %s42, %s43
      %p57 = scmp.eq.s32.totalorder %s21, 1
      %p58 = por %p56, %p57
      %p60 = scmp.ne.s32.totalorder %s43, %s59
      %p61 = scmp.eq.s32.totalorder %s21, 0
      %p62 = por %p60, %p61
      %s63 = ssub.s32 %s22, %s34
      %s64 = ssub.s32 %s23, %s30
      %s65 = sor.u32 %s63, %s64
      %p66 = scmp.eq.s32.totalorder %s65, 0
      %s68 = sadd.s32 %s67, 1
      %s69 = scalar_select %p66, %s67, %s68
      %p72 = pneg %p66
      %p73 = scmp.eq.s32.totalorder %s15, 1
      %p74 = por %p72, %p73
      %p75 = scmp.ne.s32.totalorder %s67, %s70
      %p76 = scmp.eq.s32.totalorder %s15, 0
      %p77 = por %p75, %p76
      %p78 = scmp.ne.s32.totalorder %s67, %s70
      %p79 = scmp.eq.s32.totalorder %s20, 1
      %p80 = por %p78, %p79
      %p81 = scmp.ne.s32.totalorder %s70, %s71
      %p82 = scmp.eq.s32.totalorder %s20, 0
      %p83 = por %p81, %p82
      %p84 = scmp.ne.s32.totalorder %s70, %s71
      %p85 = scmp.eq.s32.totalorder %s21, 1
      %p86 = por %p84, %p85
      %p88 = scmp.ne.s32.totalorder %s71, %s87
      %p89 = scmp.eq.s32.totalorder %s21, 0
      %p90 = por %p88, %p89
      %s92 = sadd.s32 %s91, 1
      %p95 = scmp.eq.s32.totalorder %s15, 1
      %p96 = scmp.ne.s32.totalorder %s91, %s93
      %p97 = scmp.eq.s32.totalorder %s15, 0
      %p98 = por %p96, %p97
      %p99 = scmp.ne.s32.totalorder %s91, %s93
      %p100 = scmp.eq.s32.totalorder %s20, 1
      %p101 = por %p99, %p100
      %p102 = scmp.ne.s32.totalorder %s93, %s94
      %p103 = scmp.eq.s32.totalorder %s20, 0
      %p104 = por %p102, %p103
      %p105 = scmp.ne.s32.totalorder %s93, %s94
      %p106 = scmp.eq.s32.totalorder %s21, 1
      %p107 = por %p105, %p106
      %p109 = scmp.ne.s32.totalorder %s94, %s108
      %p110 = scmp.eq.s32.totalorder %s21, 0
      %p111 = por %p109, %p110
      %s113 = sadd.s32 %s112, 1
      %p116 = scmp.eq.s32.totalorder %s15, 1
      %p117 = scmp.ne.s32.totalorder %s112, %s114
      %p118 = scmp.eq.s32.totalorder %s15, 0
      %p119 = por %p117, %p118
      %p120 = scmp.ne.s32.totalorder %s112, %s114
      %p121 = scmp.eq.s32.totalorder %s20, 1
      %p122 = por %p120, %p121
      %p123 = scmp.ne.s32.totalorder %s114, %s115
      %p124 = scmp.eq.s32.totalorder %s20, 0
      %p125 = por %p123, %p124
      %p126 = scmp.ne.s32.totalorder %s114, %s115
      %p127 = scmp.eq.s32.totalorder %s21, 1
      %p128 = por %p126, %p127
      %p130 = scmp.ne.s32.totalorder %s115, %s129
      %p131 = scmp.eq.s32.totalorder %s21, 0
      %p132 = por %p130, %p131
      %s134 = sadd.s32 %s133, 1
      %p137 = scmp.eq.s32.totalorder %s15, 1
      %p138 = scmp.ne.s32.totalorder %s133, %s135
      %p139 = scmp.eq.s32.totalorder %s15, 0
      %p140 = por %p138, %p139
      %p141 = scmp.ne.s32.totalorder %s133, %s135
      %p142 = scmp.eq.s32.totalorder %s20, 1
      %p143 = por %p141, %p142
      %p144 = scmp.ne.s32.totalorder %s135, %s136
      %p145 = scmp.eq.s32.totalorder %s20, 0
      %p146 = por %p144, %p145
      %p147 = scmp.ne.s32.totalorder %s135, %s136
      %p148 = scmp.eq.s32.totalorder %s21, 1
      %p149 = por %p147, %p148
      %p151 = scmp.ne.s32.totalorder %s136, %s150
      %p152 = scmp.eq.s32.totalorder %s21, 0
      %p153 = por %p151, %p152
      %s155 = sadd.s32 %s154, 1
      %p158 = scmp.eq.s32.totalorder %s15, 1
      %p159 = scmp.ne.s32.totalorder %s154, %s156
      %p160 = scmp.eq.s32.totalorder %s15, 0
      %p161 = por %p159, %p160
      %p162 = scmp.ne.s32.totalorder %s154, %s156
      %p163 = scmp.eq.s32.totalorder %s20, 1
      %p164 = por %p162, %p163
      %p165 = scmp.ne.s32.totalorder %s156, %s157
      %p166 = scmp.eq.s32.totalorder %s20, 0
      %p167 = por %p165, %p166
      %p168 = scmp.ne.s32.totalorder %s156, %s157
      %p169 = scmp.eq.s32.totalorder %s21, 1
      %p170 = por %p168, %p169
      %p172 = scmp.ne.s32.totalorder %s157, %s171
      %p173 = scmp.eq.s32.totalorder %s21, 0
      %p174 = por %p172, %p173
      %s175 = ssub.s32 %s22, %s34
      %s176 = ssub.s32 %s23, %s30
      %s177 = sor.u32 %s175, %s176
      %p178 = scmp.eq.s32.totalorder %s177, 0
      %s180 = sadd.s32 %s179, 1
      %s181 = scalar_select %p178, %s179, %s180
      %p184 = pneg %p178
      %p185 = scmp.eq.s32.totalorder %s15, 1
      %p186 = por %p184, %p185
      %p187 = scmp.ne.s32.totalorder %s179, %s182
      %p188 = scmp.eq.s32.totalorder %s15, 0
      %p189 = por %p187, %p188
      %p190 = scmp.ne.s32.totalorder %s179, %s182
      %p191 = scmp.eq.s32.totalorder %s20, 1
      %p192 = por %p190, %p191
      %p193 = scmp.ne.s32.totalorder %s182, %s183
      %p194 = scmp.eq.s32.totalorder %s20, 0
      %p195 = por %p193, %p194
      %p196 = scmp.ne.s32.totalorder %s182, %s183
      %p197 = scmp.eq.s32.totalorder %s21, 1
      %p198 = por %p196, %p197
      %p200 = scmp.ne.s32.totalorder %s183, %s199
      %p201 = scmp.eq.s32.totalorder %s21, 0
      %p202 = por %p200, %p201
      %p203 = scmp.le.s32.totalorder 1, %s15
      %p204 = scmp.lt.s32.totalorder %s15, 3
      %p205 = pnand %p203, %p204
      %p206 = pneg %p205
      // Predicated region
      $region9: #{tpu_custom_call.1} parent=5 // pred_check
        _
      $region10: #{tpu_custom_call.1} parent=5 // pred_check_branch
        %208 = sbr.rel (%p205) target = $region12
      $region11: #{tpu_custom_call.1} parent=5 // pred_region
        %s209 = ssub.s32 %s15, 1
        // Predicated region
        $region13: #{tpu_custom_call.1} parent=11 // pred_check
          %p210 = pneg %p104
        $region14: #{tpu_custom_call.1} parent=11 // pred_check_branch
          %212 = sbr.rel (%p210) target = $region16
        $region15: #{tpu_custom_call.1} parent=11 // pred_region
          _
        $region16: #{tpu_custom_call.1} parent=11 // pred_fallthru
          _
        // Predicated region
        $region17: #{tpu_custom_call.1} parent=11 // pred_check
          %p213 = pneg %p125
        $region18: #{tpu_custom_call.1} parent=11 // pred_check_branch
          %215 = sbr.rel (%p213) target = $region20
        $region19: #{tpu_custom_call.1} parent=11 // pred_region
          _
        $region20: #{tpu_custom_call.1} parent=11 // pred_fallthru
          _
        // Predicated region
        $region21: #{tpu_custom_call.1} parent=11 // pred_check
          %p216 = pneg %p146
        $region22: #{tpu_custom_call.1} parent=11 // pred_check_branch
          %218 = sbr.rel (%p216) target = $region24
        $region23: #{tpu_custom_call.1} parent=11 // pred_region
          _
        $region24: #{tpu_custom_call.1} parent=11 // pred_fallthru
          _
        // Predicated region
        $region25: #{tpu_custom_call.1} parent=11 // pred_check
          %p219 = pneg %p167
        $region26: #{tpu_custom_call.1} parent=11 // pred_check_branch
          %221 = sbr.rel (%p219) target = $region28
        $region27: #{tpu_custom_call.1} parent=11 // pred_region
          _
        $region28: #{tpu_custom_call.1} parent=11 // pred_fallthru
          _
      $region12: #{tpu_custom_call.1} parent=5 // pred_fallthru
        _
      %p222 = scmp.lt.s32.totalorder %s15, 2
      // Predicated region
      $region29: #{tpu_custom_call.1} parent=5 // pred_check
        %p223 = pneg %p222
      $region30: #{tpu_custom_call.1} parent=5 // pred_check_branch
        %225 = sbr.rel (%p223) target = $region32
      $region31: #{tpu_custom_call.1} parent=5 // pred_region
        // Predicated region
        $region33: #{tpu_custom_call.1} parent=31 // pred_check
          %p226 = pneg %p49
        $region34: #{tpu_custom_call.1} parent=31 // pred_check_branch
          %228 = sbr.rel (%p226) target = $region36
        $region35: #{tpu_custom_call.1} parent=31 // pred_region
          %p229 = scmp.lt.s32.totalorder %s22, 1
          %s230 = scalar_select %p229, %s22, 1
          %p231 = scmp.lt.s32.totalorder %s23, 0
          %s232 = scalar_select %p231, %s23, 0
          %s233 = smul.addr %s232, 12
          %s234 = smul.addr %s230, 12
          %s235 = sadd.s32 %s233, %s234
          %s236 = smul.addr %s235, 4
          %s237 = scalar_lea.vmem %s0, %s236
        $region36: #{tpu_custom_call.1} parent=31 // pred_fallthru
          _
        // Predicated region
        $region37: #{tpu_custom_call.1} parent=31 // pred_check
          %p238 = pneg %p77
        $region38: #{tpu_custom_call.1} parent=31 // pred_check_branch
          %240 = sbr.rel (%p238) target = $region40
        $region39: #{tpu_custom_call.1} parent=31 // pred_region
          %p241 = scmp.lt.s32.totalorder %s22, 1
          %s242 = scalar_select %p241, %s22, 1
          %p243 = scmp.lt.s32.totalorder %s23, 0
          %s244 = scalar_select %p243, %s23, 0
          %s245 = smul.addr %s244, 12
          %s246 = smul.addr %s242, 12
          %s247 = sadd.s32 %s245, %s246
          %s248 = smul.addr %s247, 4
          %s249 = scalar_lea.vmem %s1, %s248
        $region40: #{tpu_custom_call.1} parent=31 // pred_fallthru
          _
      $region32: #{tpu_custom_call.1} parent=5 // pred_fallthru
        _
      %p250 = scmp.le.s32.totalorder 1, %s15
      %p251 = scmp.lt.s32.totalorder %s15, 3
      %p252 = pnand %p250, %p251
      %p253 = pneg %p252
      // Predicated region
      $region41: #{tpu_custom_call.1} parent=5 // pred_check
        _
      $region42: #{tpu_custom_call.1} parent=5 // pred_check_branch
        %255 = sbr.rel (%p252) target = $region44
      $region43: #{tpu_custom_call.1} parent=5 // pred_region
        %s256 = ssub.s32 %s15, 1
        %p257 = scmp.lt.s32.totalorder %s24, 1
        %s258 = scalar_select %p257, %s24, 1
        %p259 = scmp.lt.s32.totalorder %s25, 0
        %s260 = scalar_select %p259, %s25, 0
        %s261 = smul.addr %s260, 12
        %s262 = smul.addr %s258, 12
        %s263 = sadd.s32 %s261, %s262
        %s264 = smul.addr %s263, 4
        %s265 = scalar_lea.vmem %s0, %s264
        %p266 = pneg %p55
        %p267 = pneg %p52
        %p268 = scmp.lt.s32.totalorder %s24, 1
        %s269 = scalar_select %p268, %s24, 1
        %p270 = scmp.lt.s32.totalorder %s25, 0
        %s271 = scalar_select %p270, %s25, 0
        %s272 = smul.addr %s271, 12
        %s273 = smul.addr %s269, 12
        %s274 = sadd.s32 %s272, %s273
        %s275 = smul.addr %s274, 4
        %s276 = scalar_lea.vmem %s1, %s275
        %p277 = pneg %p83
        %p278 = pneg %p80
        %p279 = pneg %p104
        %p280 = pneg %p101
        %p281 = pneg %p125
        %p282 = pneg %p122
        %p283 = pneg %p146
        %p284 = pneg %p143
        %p285 = pneg %p167
        %p286 = pneg %p164
        %p287 = pneg %p195
        %p288 = pneg %p192
        %s289 = sand.u32 %s182, 1
        %s290 = scalar_lea.sflag [#allocation5], %s289
        %s291 = sand.u32 %s182, 1
        %s292 = smul.addr %s291, 16
        %s293 = scalar_lea.vmem [#allocation4], %s292
        %p294 = scmp.lt.s32.totalorder %s24, 1
        %s295 = scalar_select %p294, %s24, 1
        %p296 = scmp.lt.s32.totalorder %s25, 0
        %s297 = scalar_select %p296, %s25, 0
        %s298 = smul.addr %s297, 12
        %s299 = smul.addr %s295, 12
        %s300 = sadd.s32 %s298, %s299
        %s301 = smul.addr %s300, 4
        %s302 = scalar_lea.vmem %s0, %s301
        %p303 = scmp.lt.s32.totalorder %s24, 1
        %s304 = scalar_select %p303, %s24, 1
        %p305 = scmp.lt.s32.totalorder %s25, 0
        %s306 = scalar_select %p305, %s25, 0
        %s307 = smul.addr %s306, 12
        %s308 = smul.addr %s304, 12
        %s309 = sadd.s32 %s307, %s308
        %s310 = smul.addr %s309, 4
        %s311 = scalar_lea.vmem %s1, %s310
        %s312 = smul.u32 4, %s25
        %v314 = vld [vmem:[%s302] sm:$0xf]
        %v315 = vld [vmem:[%s302 + $0x4] sm:$0xf]
        %v316 = vld [vmem:[%s302 + $0x8] sm:$0xf]
        %v317 = vld [vmem:[%s302 + $0xc] sm:$0xf]
        %v318 = vld [vmem:[%s302 + $0x10] sm:$0xf]
        %v319 = vld [vmem:[%s302 + $0x14] sm:$0xf]
        %v320 = vld [vmem:[%s302 + $0x18] sm:$0xf]
        %v321 = vld [vmem:[%s302 + $0x1c] sm:$0xf]
        %v322 = vld [vmem:[%s302 + $0x20] sm:$0xf]
        %v323 = vld [vmem:[%s2] sm:$0xf]
        %v324 = vld [vmem:[%s2 + $0x4] sm:$0xf]
        %v325 = vld [vmem:[%s2 + $0x8] sm:$0xf]
        %v326 = vld [vmem:[%s2 + $0xc] sm:$0x3]
        %v336 = vunpack.c.l.b16 %v314
        %v337 = vunpack.c.l.b16 %v315
        %v338 = vunpack.c.l.b16 %v316
        %v339 = vunpack.c.l.b16 %v317
        %v340 = vunpack.c.l.b16 %v318
        %v341 = vunpack.c.l.b16 %v319
        %v342 = vunpack.c.l.b16 %v320
        %v343 = vunpack.c.l.b16 %v321
        %v344 = vunpack.c.l.b16 %v322
        %v345 = vpack.c.b16 %v337, %v336
        %v346 = vpack.c.b16 %v339, %v338
        %v347 = vpack.c.b16 %v341, %v340
        %v348 = vpack.c.b16 %v343, %v342
        %v349 = vpack.c.b16 %v344, %v344
        %v354 = vunpack.c.l.b16 %v323
        %v355 = vunpack.c.l.b16 %v324
        %v356 = vunpack.c.l.b16 %v325
        %v357 = vunpack.c.l.b16 %v326
        %v358 = vpack.c.b16 %v355, %v354
        %v359 = vpack.c.b16 %v357, %v356
        %vm361 = vcmask 228352
        %v363 = vsel %vm361, %v345, 0
        %v366 = vsel %vm361, %v346, 0
        %v369 = vsel %vm361, %v347, 0
        %v372 = vsel %vm361, %v348, 0
        %v375 = vsel %vm361, %v349, 0
        %vm377 = vcmask 1045504
        %v379 = vsel %vm377, %v359, 0
        %381 = vmatprep.subr.bf16.mxu0 0
        %382 = vmatpush1.bf16.msra.mxu0 0
        %383 = vmatprep.subr.bf16.mxu0 0
        %384 = vmatpush1.bf16.msra.mxu0 0
        %385 = vmatprep.subr.bf16.mxu0 0
        %386 = vmatpush1.bf16.msra.mxu0 0
        %387 = vmatprep.subr.bf16.mxu0 0
        %388 = vmatpush1.bf16.msra.mxu0 0
        %389 = vmatprep.subr.bf16.mxu0 0
        %390 = vmatpush1.bf16.msra.mxu0 0
        %391 = vmatprep.subr.bf16.mxu0 0
        %392 = vmatpush1.bf16.msra.mxu0 0
        %393 = vmatprep.subr.bf16.mxu0 0
        %394 = vmatpush1.bf16.msra.mxu0 %v379
        %395 = vmatprep.subr.bf16.mxu0 0
        %396 = vmatpush1.bf16.msra.mxu0 %v358
        %397 = vmatprep.subr.bf16.mxu0 0
        %398 = vmatpush2.bf16.msra.mxu0 0
        %399 = vmatprep.subr.bf16.mxu0 0
        %400 = vmatpush2.bf16.msra.mxu0 0
        %401 = vmatprep.subr.bf16.mxu0 0
        %402 = vmatpush2.bf16.msra.mxu0 0
        %403 = vmatprep.subr.bf16.mxu0 0
        %404 = vmatpush2.bf16.msra.mxu0 0
        %405 = vmatprep.subr.bf16.mxu0 0
        %406 = vmatpush2.bf16.msra.mxu0 0
        %407 = vmatprep.subr.bf16.mxu0 0
        %408 = vmatpush2.bf16.msra.mxu0 0
        %409 = vmatprep.subr.bf16.mxu0 0
        %410 = vmatpush2.bf16.msra.mxu0 0
        %411 = vmatprep.subr.bf16.mxu0 0
        %412 = vmatpush2.bf16.msra.mxu0 0
        %413 = vmatprep.mubr.bf16.mxu0 0
        %414 = vmatmul.mubr.bf16.gmra.mxu0 %v363
        %v415 = vpop.f32.mrf.mxu0
        %v416 = vadd.f32 0.0, %v415
        %v417 = vpop.f32.mrf.mxu0
        %v418 = vpop.f32.mrf.mxu0
        %v419 = vadd.f32 0.0, %v418
        %v420 = vpop.f32.mrf.mxu0
        %421 = vmatprep.mubr.bf16.mxu0 0
        %422 = vmatmul.mubr.bf16.gmra.mxu0 %v366
        %v423 = vpop.f32.mrf.mxu0
        %v424 = vadd.f32 0.0, %v423
        %v425 = vpop.f32.mrf.mxu0
        %v426 = vpop.f32.mrf.mxu0
        %v427 = vadd.f32 0.0, %v426
        %v428 = vpop.f32.mrf.mxu0
        %429 = vmatprep.mubr.bf16.mxu0 0
        %430 = vmatmul.mubr.bf16.gmra.mxu0 %v369
        %v431 = vpop.f32.mrf.mxu0
        %v432 = vadd.f32 0.0, %v431
        %v433 = vpop.f32.mrf.mxu0
        %v434 = vpop.f32.mrf.mxu0
        %v435 = vadd.f32 0.0, %v434
        %v436 = vpop.f32.mrf.mxu0
        %437 = vmatprep.mubr.bf16.mxu0 0
        %438 = vmatmul.mubr.bf16.gmra.mxu0 %v372
        %v439 = vpop.f32.mrf.mxu0
        %v440 = vadd.f32 0.0, %v439
        %v441 = vpop.f32.mrf.mxu0
        %v442 = vpop.f32.mrf.mxu0
        %v443 = vadd.f32 0.0, %v442
        %v444 = vpop.f32.mrf.mxu0
        %445 = vmatprep.mubr.bf16.mxu0 0
        %446 = vmatmul.mubr.bf16.gmra.mxu0 %v375
        %v447 = vpop.f32.mrf.mxu0
        %v448 = vadd.f32 0.0, %v447
        %v449 = vpop.f32.mrf.mxu0
        %v450 = vpop.f32.mrf.mxu0
        %v451 = vpop.f32.mrf.mxu0
        %452 = vdwg.mxu0
        %vm453 = vcmask 261120
        %454 = vst.msk [vmem:[#allocation2] sm:$0xff] %vm453, %v416
        %455 = vst.msk [vmem:[#allocation2 + $0x8] sm:$0xff] %vm453, %v419
        %456 = vst.msk [vmem:[#allocation2 + $0x10] sm:$0xff] %vm453, %v424
        %457 = vst.msk [vmem:[#allocation2 + $0x18] sm:$0xff] %vm453, %v427
        %458 = vst.msk [vmem:[#allocation2 + $0x20] sm:$0xff] %vm453, %v432
        %459 = vst.msk [vmem:[#allocation2 + $0x28] sm:$0xff] %vm453, %v435
        %460 = vst.msk [vmem:[#allocation2 + $0x30] sm:$0xff] %vm453, %v440
        %461 = vst.msk [vmem:[#allocation2 + $0x38] sm:$0xff] %vm453, %v443
        %462 = vst.msk [vmem:[#allocation2 + $0x40] sm:$0xff] %vm453, %v448
        %v463 = vld [vmem:[%s302 + $0x4] sm:$0xf]
        %v464 = vld [vmem:[%s302 + $0x8] sm:$0xf]
        %v465 = vld [vmem:[%s302 + $0xc] sm:$0xf]
        %v466 = vld [vmem:[%s302 + $0x10] sm:$0xf]
        %v467 = vld [vmem:[%s302 + $0x14] sm:$0xf]
        %v468 = vld [vmem:[%s302 + $0x18] sm:$0xf]
        %v469 = vld [vmem:[%s302 + $0x1c] sm:$0xf]
        %v470 = vld [vmem:[%s302 + $0x20] sm:$0xf]
        %v471 = vld [vmem:[%s302 + $0x24] sm:$0xf]
        %v472 = vld [vmem:[#allocation2] sm:$0xff]
        %v473 = vld [vmem:[#allocation2 + $0x8] sm:$0xff]
        %v474 = vld [vmem:[#allocation2 + $0x10] sm:$0xff]
        %v475 = vld [vmem:[#allocation2 + $0x18] sm:$0xff]
        %v476 = vld [vmem:[#allocation2 + $0x20] sm:$0xff]
        %v477 = vld [vmem:[#allocation2 + $0x28] sm:$0xff]
        %v478 = vld [vmem:[#allocation2 + $0x30] sm:$0xff]
        %v479 = vld [vmem:[#allocation2 + $0x38] sm:$0xff]
        %v480 = vld [vmem:[#allocation2 + $0x40] sm:$0xff]
        %s481 = scalar_lea.vmem %s2, 16
        %v482 = vld [vmem:[%s481] sm:$0xf]
        %v483 = vld [vmem:[%s481 + $0x4] sm:$0xf]
        %v484 = vld [vmem:[%s481 + $0x8] sm:$0xf]
        %v485 = vld [vmem:[%s481 + $0xc] sm:$0x3]
        %v495 = vunpack.c.l.b16 %v463
        %v496 = vunpack.c.l.b16 %v464
        %v497 = vunpack.c.l.b16 %v465
        %v498 = vunpack.c.l.b16 %v466
        %v499 = vunpack.c.l.b16 %v467
        %v500 = vunpack.c.l.b16 %v468
        %v501 = vunpack.c.l.b16 %v469
        %v502 = vunpack.c.l.b16 %v470
        %v503 = vunpack.c.l.b16 %v471
        %v504 = vpack.c.b16 %v496, %v495
        %v505 = vpack.c.b16 %v498, %v497
        %v506 = vpack.c.b16 %v500, %v499
        %v507 = vpack.c.b16 %v502, %v501
        %v508 = vpack.c.b16 %v503, %v503
        %v513 = vunpack.c.l.b16 %v482
        %v514 = vunpack.c.l.b16 %v483
        %v515 = vunpack.c.l.b16 %v484
        %v516 = vunpack.c.l.b16 %v485
        %v517 = vpack.c.b16 %v514, %v513
        %v518 = vpack.c.b16 %v516, %v515
        %v521 = vsel %vm361, %v504, 0
        %v524 = vsel %vm361, %v505, 0
        %v527 = vsel %vm361, %v506, 0
        %v530 = vsel %vm361, %v507, 0
        %v533 = vsel %vm361, %v508, 0
        %v536 = vsel %vm377, %v518, 0
        %538 = vmatprep.subr.bf16.mxu0 0
        %539 = vmatpush1.bf16.msra.mxu0 0
        %540 = vmatprep.subr.bf16.mxu0 0
        %541 = vmatpush1.bf16.msra.mxu0 0
        %542 = vmatprep.subr.bf16.mxu0 0
        %543 = vmatpush1.bf16.msra.mxu0 0
        %544 = vmatprep.subr.bf16.mxu0 0
        %545 = vmatpush1.bf16.msra.mxu0 0
        %546 = vmatprep.subr.bf16.mxu0 0
        %547 = vmatpush1.bf16.msra.mxu0 0
        %548 = vmatprep.subr.bf16.mxu0 0
        %549 = vmatpush1.bf16.msra.mxu0 0
        %550 = vmatprep.subr.bf16.mxu0 0
        %551 = vmatpush1.bf16.msra.mxu0 %v536
        %552 = vmatprep.subr.bf16.mxu0 0
        %553 = vmatpush1.bf16.msra.mxu0 %v517
        %554 = vmatprep.subr.bf16.mxu0 0
        %555 = vmatpush2.bf16.msra.mxu0 0
        %556 = vmatprep.subr.bf16.mxu0 0
        %557 = vmatpush2.bf16.msra.mxu0 0
        %558 = vmatprep.subr.bf16.mxu0 0
        %559 = vmatpush2.bf16.msra.mxu0 0
        %560 = vmatprep.subr.bf16.mxu0 0
        %561 = vmatpush2.bf16.msra.mxu0 0
        %562 = vmatprep.subr.bf16.mxu0 0
        %563 = vmatpush2.bf16.msra.mxu0 0
        %564 = vmatprep.subr.bf16.mxu0 0
        %565 = vmatpush2.bf16.msra.mxu0 0
        %566 = vmatprep.subr.bf16.mxu0 0
        %567 = vmatpush2.bf16.msra.mxu0 0
        %568 = vmatprep.subr.bf16.mxu0 0
        %569 = vmatpush2.bf16.msra.mxu0 0
        %570 = vmatprep.mubr.bf16.mxu0 0
        %571 = vmatmul.mubr.bf16.gmra.mxu0 %v521
        %v572 = vpop.f32.mrf.mxu0
        %v573 = vadd.f32 0.0, %v572
        %v574 = vpop.f32.mrf.mxu0
        %v575 = vpop.f32.mrf.mxu0
        %v576 = vadd.f32 0.0, %v575
        %v577 = vpop.f32.mrf.mxu0
        %578 = vmatprep.mubr.bf16.mxu0 0
        %579 = vmatmul.mubr.bf16.gmra.mxu0 %v524
        %v580 = vpop.f32.mrf.mxu0
        %v581 = vadd.f32 0.0, %v580
        %v582 = vpop.f32.mrf.mxu0
        %v583 = vpop.f32.mrf.mxu0
        %v584 = vadd.f32 0.0, %v583
        %v585 = vpop.f32.mrf.mxu0
        %586 = vmatprep.mubr.bf16.mxu0 0
        %587 = vmatmul.mubr.bf16.gmra.mxu0 %v527
        %v588 = vpop.f32.mrf.mxu0
        %v589 = vadd.f32 0.0, %v588
        %v590 = vpop.f32.mrf.mxu0
        %v591 = vpop.f32.mrf.mxu0
        %v592 = vadd.f32 0.0, %v591
        %v593 = vpop.f32.mrf.mxu0
        %594 = vmatprep.mubr.bf16.mxu0 0
        %595 = vmatmul.mubr.bf16.gmra.mxu0 %v530
        %v596 = vpop.f32.mrf.mxu0
        %v597 = vadd.f32 0.0, %v596
        %v598 = vpop.f32.mrf.mxu0
        %v599 = vpop.f32.mrf.mxu0
        %v600 = vadd.f32 0.0, %v599
        %v601 = vpop.f32.mrf.mxu0
        %602 = vmatprep.mubr.bf16.mxu0 0
        %603 = vmatmul.mubr.bf16.gmra.mxu0 %v533
        %v604 = vpop.f32.mrf.mxu0
        %v605 = vadd.f32 0.0, %v604
        %v606 = vpop.f32.mrf.mxu0
        %v607 = vpop.f32.mrf.mxu0
        %v608 = vpop.f32.mrf.mxu0
        %609 = vdwg.mxu0
        %v610 = vadd.f32 %v472, %v573
        %v611 = vadd.f32 %v473, %v576
        %v612 = vadd.f32 %v474, %v581
        %v613 = vadd.f32 %v475, %v584
        %v614 = vadd.f32 %v476, %v589
        %v615 = vadd.f32 %v477, %v592
        %v616 = vadd.f32 %v478, %v597
        %v617 = vadd.f32 %v479, %v600
        %v618 = vadd.f32 %v480, %v605
        %619 = vst.msk [vmem:[#allocation2] sm:$0xff] %vm453, %v610
        %620 = vst.msk [vmem:[#allocation2 + $0x8] sm:$0xff] %vm453, %v611
        %621 = vst.msk [vmem:[#allocation2 + $0x10] sm:$0xff] %vm453, %v612
        %622 = vst.msk [vmem:[#allocation2 + $0x18] sm:$0xff] %vm453, %v613
        %623 = vst.msk [vmem:[#allocation2 + $0x20] sm:$0xff] %vm453, %v614
        %624 = vst.msk [vmem:[#allocation2 + $0x28] sm:$0xff] %vm453, %v615
        %625 = vst.msk [vmem:[#allocation2 + $0x30] sm:$0xff] %vm453, %v616
        %626 = vst.msk [vmem:[#allocation2 + $0x38] sm:$0xff] %vm453, %v617
        %627 = vst.msk [vmem:[#allocation2 + $0x40] sm:$0xff] %vm453, %v618
        %v628 = vld [vmem:[%s302 + $0x8] sm:$0xf]
        %v629 = vld [vmem:[%s302 + $0xc] sm:$0xf]
        %v630 = vld [vmem:[%s302 + $0x10] sm:$0xf]
        %v631 = vld [vmem:[%s302 + $0x14] sm:$0xf]
        %v632 = vld [vmem:[%s302 + $0x18] sm:$0xf]
        %v633 = vld [vmem:[%s302 + $0x1c] sm:$0xf]
        %v634 = vld [vmem:[%s302 + $0x20] sm:$0xf]
        %v635 = vld [vmem:[%s302 + $0x24] sm:$0xf]
        %v636 = vld [vmem:[%s302 + $0x28] sm:$0xf]
        %v637 = vld [vmem:[#allocation2] sm:$0xff]
        %v638 = vld [vmem:[#allocation2 + $0x8] sm:$0xff]
        %v639 = vld [vmem:[#allocation2 + $0x10] sm:$0xff]
        %v640 = vld [vmem:[#allocation2 + $0x18] sm:$0xff]
        %v641 = vld [vmem:[#allocation2 + $0x20] sm:$0xff]
        %v642 = vld [vmem:[#allocation2 + $0x28] sm:$0xff]
        %v643 = vld [vmem:[#allocation2 + $0x30] sm:$0xff]
        %v644 = vld [vmem:[#allocation2 + $0x38] sm:$0xff]
        %v645 = vld [vmem:[#allocation2 + $0x40] sm:$0xff]
        %s646 = scalar_lea.vmem %s2, 32
        %v647 = vld [vmem:[%s646] sm:$0xf]
        %v648 = vld [vmem:[%s646 + $0x4] sm:$0xf]
        %v649 = vld [vmem:[%s646 + $0x8] sm:$0xf]
        %v650 = vld [vmem:[%s646 + $0xc] sm:$0x3]
        %v660 = vunpack.c.l.b16 %v628
        %v661 = vunpack.c.l.b16 %v629
        %v662 = vunpack.c.l.b16 %v630
        %v663 = vunpack.c.l.b16 %v631
        %v664 = vunpack.c.l.b16 %v632
        %v665 = vunpack.c.l.b16 %v633
        %v666 = vunpack.c.l.b16 %v634
        %v667 = vunpack.c.l.b16 %v635
        %v668 = vunpack.c.l.b16 %v636
        %v669 = vpack.c.b16 %v661, %v660
        %v670 = vpack.c.b16 %v663, %v662
        %v671 = vpack.c.b16 %v665, %v664
        %v672 = vpack.c.b16 %v667, %v666
        %v673 = vpack.c.b16 %v668, %v668
        %v678 = vunpack.c.l.b16 %v647
        %v679 = vunpack.c.l.b16 %v648
        %v680 = vunpack.c.l.b16 %v649
        %v681 = vunpack.c.l.b16 %v650
        %v682 = vpack.c.b16 %v679, %v678
        %v683 = vpack.c.b16 %v681, %v680
        %v686 = vsel %vm361, %v669, 0
        %v689 = vsel %vm361, %v670, 0
        %v692 = vsel %vm361, %v671, 0
        %v695 = vsel %vm361, %v672, 0
        %v698 = vsel %vm361, %v673, 0
        %v701 = vsel %vm377, %v683, 0
        %703 = vmatprep.subr.bf16.mxu0 0
        %704 = vmatpush1.bf16.msra.mxu0 0
        %705 = vmatprep.subr.bf16.mxu0 0
        %706 = vmatpush1.bf16.msra.mxu0 0
        %707 = vmatprep.subr.bf16.mxu0 0
        %708 = vmatpush1.bf16.msra.mxu0 0
        %709 = vmatprep.subr.bf16.mxu0 0
        %710 = vmatpush1.bf16.msra.mxu0 0
        %711 = vmatprep.subr.bf16.mxu0 0
        %712 = vmatpush1.bf16.msra.mxu0 0
        %713 = vmatprep.subr.bf16.mxu0 0
        %714 = vmatpush1.bf16.msra.mxu0 0
        %715 = vmatprep.subr.bf16.mxu0 0
        %716 = vmatpush1.bf16.msra.mxu0 %v701
        %717 = vmatprep.subr.bf16.mxu0 0
        %718 = vmatpush1.bf16.msra.mxu0 %v682
        %719 = vmatprep.subr.bf16.mxu0 0
        %720 = vmatpush2.bf16.msra.mxu0 0
        %721 = vmatprep.subr.bf16.mxu0 0
        %722 = vmatpush2.bf16.msra.mxu0 0
        %723 = vmatprep.subr.bf16.mxu0 0
        %724 = vmatpush2.bf16.msra.mxu0 0
        %725 = vmatprep.subr.bf16.mxu0 0
        %726 = vmatpush2.bf16.msra.mxu0 0
        %727 = vmatprep.subr.bf16.mxu0 0
        %728 = vmatpush2.bf16.msra.mxu0 0
        %729 = vmatprep.subr.bf16.mxu0 0
        %730 = vmatpush2.bf16.msra.mxu0 0
        %731 = vmatprep.subr.bf16.mxu0 0
        %732 = vmatpush2.bf16.msra.mxu0 0
        %733 = vmatprep.subr.bf16.mxu0 0
        %734 = vmatpush2.bf16.msra.mxu0 0
        %735 = vmatprep.mubr.bf16.mxu0 0
        %736 = vmatmul.mubr.bf16.gmra.mxu0 %v686
        %v737 = vpop.f32.mrf.mxu0
        %v738 = vadd.f32 0.0, %v737
        %v739 = vpop.f32.mrf.mxu0
        %v740 = vpop.f32.mrf.mxu0
        %v741 = vadd.f32 0.0, %v740
        %v742 = vpop.f32.mrf.mxu0
        %743 = vmatprep.mubr.bf16.mxu0 0
        %744 = vmatmul.mubr.bf16.gmra.mxu0 %v689
        %v745 = vpop.f32.mrf.mxu0
        %v746 = vadd.f32 0.0, %v745
        %v747 = vpop.f32.mrf.mxu0
        %v748 = vpop.f32.mrf.mxu0
        %v749 = vadd.f32 0.0, %v748
        %v750 = vpop.f32.mrf.mxu0
        %751 = vmatprep.mubr.bf16.mxu0 0
        %752 = vmatmul.mubr.bf16.gmra.mxu0 %v692
        %v753 = vpop.f32.mrf.mxu0
        %v754 = vadd.f32 0.0, %v753
        %v755 = vpop.f32.mrf.mxu0
        %v756 = vpop.f32.mrf.mxu0
        %v757 = vadd.f32 0.0, %v756
        %v758 = vpop.f32.mrf.mxu0
        %759 = vmatprep.mubr.bf16.mxu0 0
        %760 = vmatmul.mubr.bf16.gmra.mxu0 %v695
        %v761 = vpop.f32.mrf.mxu0
        %v762 = vadd.f32 0.0, %v761
        %v763 = vpop.f32.mrf.mxu0
        %v764 = vpop.f32.mrf.mxu0
        %v765 = vadd.f32 0.0, %v764
        %v766 = vpop.f32.mrf.mxu0
        %767 = vmatprep.mubr.bf16.mxu0 0
        %768 = vmatmul.mubr.bf16.gmra.mxu0 %v698
        %v769 = vpop.f32.mrf.mxu0
        %v770 = vadd.f32 0.0, %v769
        %v771 = vpop.f32.mrf.mxu0
        %v772 = vpop.f32.mrf.mxu0
        %v773 = vpop.f32.mrf.mxu0
        %774 = vdwg.mxu0
        %v775 = vadd.f32 %v637, %v738
        %v776 = vadd.f32 %v638, %v741
        %v777 = vadd.f32 %v639, %v746
        %v778 = vadd.f32 %v640, %v749
        %v779 = vadd.f32 %v641, %v754
        %v780 = vadd.f32 %v642, %v757
        %v781 = vadd.f32 %v643, %v762
        %v782 = vadd.f32 %v644, %v765
        %v783 = vadd.f32 %v645, %v770
        %784 = vst.msk [vmem:[#allocation2] sm:$0xff] %vm453, %v775
        %785 = vst.msk [vmem:[#allocation2 + $0x8] sm:$0xff] %vm453, %v776
        %786 = vst.msk [vmem:[#allocation2 + $0x10] sm:$0xff] %vm453, %v777
        %787 = vst.msk [vmem:[#allocation2 + $0x18] sm:$0xff] %vm453, %v778
        %788 = vst.msk [vmem:[#allocation2 + $0x20] sm:$0xff] %vm453, %v779
        %789 = vst.msk [vmem:[#allocation2 + $0x28] sm:$0xff] %vm453, %v780
        %790 = vst.msk [vmem:[#allocation2 + $0x30] sm:$0xff] %vm453, %v781
        %791 = vst.msk [vmem:[#allocation2 + $0x38] sm:$0xff] %vm453, %v782
        %792 = vst.msk [vmem:[#allocation2 + $0x40] sm:$0xff] %vm453, %v783
        %v793 = vld [vmem:[%s302 + $0xc] sm:$0xf]
        %v794 = vld [vmem:[%s302 + $0x10] sm:$0xf]
        %v795 = vld [vmem:[%s302 + $0x14] sm:$0xf]
        %v796 = vld [vmem:[%s302 + $0x18] sm:$0xf]
        %v797 = vld [vmem:[%s302 + $0x1c] sm:$0xf]
        %v798 = vld [vmem:[%s302 + $0x20] sm:$0xf]
        %v799 = vld [vmem:[%s302 + $0x24] sm:$0xf]
        %v800 = vld [vmem:[%s302 + $0x28] sm:$0xf]
        %v801 = vld [vmem:[%s302 + $0x2c] sm:$0xf]
        %v802 = vld [vmem:[#allocation2] sm:$0xff]
        %v803 = vld [vmem:[#allocation2 + $0x8] sm:$0xff]
        %v804 = vld [vmem:[#allocation2 + $0x10] sm:$0xff]
        %v805 = vld [vmem:[#allocation2 + $0x18] sm:$0xff]
        %v806 = vld [vmem:[#allocation2 + $0x20] sm:$0xff]
        %v807 = vld [vmem:[#allocation2 + $0x28] sm:$0xff]
        %v808 = vld [vmem:[#allocation2 + $0x30] sm:$0xff]
        %v809 = vld [vmem:[#allocation2 + $0x38] sm:$0xff]
        %v810 = vld [vmem:[#allocation2 + $0x40] sm:$0xff]
        %s811 = scalar_lea.vmem %s2, 48
        %v812 = vld [vmem:[%s811] sm:$0xf]
        %v813 = vld [vmem:[%s811 + $0x4] sm:$0xf]
        %v814 = vld [vmem:[%s811 + $0x8] sm:$0xf]
        %v815 = vld [vmem:[%s811 + $0xc] sm:$0x3]
        %v825 = vunpack.c.l.b16 %v793
        %v826 = vunpack.c.l.b16 %v794
        %v827 = vunpack.c.l.b16 %v795
        %v828 = vunpack.c.l.b16 %v796
        %v829 = vunpack.c.l.b16 %v797
        %v830 = vunpack.c.l.b16 %v798
        %v831 = vunpack.c.l.b16 %v799
        %v832 = vunpack.c.l.b16 %v800
        %v833 = vunpack.c.l.b16 %v801
        %v834 = vpack.c.b16 %v826, %v825
        %v835 = vpack.c.b16 %v828, %v827
        %v836 = vpack.c.b16 %v830, %v829
        %v837 = vpack.c.b16 %v832, %v831
        %v838 = vpack.c.b16 %v833, %v833
        %v843 = vunpack.c.l.b16 %v812
        %v844 = vunpack.c.l.b16 %v813
        %v845 = vunpack.c.l.b16 %v814
        %v846 = vunpack.c.l.b16 %v815
        %v847 = vpack.c.b16 %v844, %v843
        %v848 = vpack.c.b16 %v846, %v845
        %v851 = vsel %vm361, %v834, 0
        %v854 = vsel %vm361, %v835, 0
        %v857 = vsel %vm361, %v836, 0
        %v860 = vsel %vm361, %v837, 0
        %v863 = vsel %vm361, %v838, 0
        %v866 = vsel %vm377, %v848, 0
        %868 = vmatprep.subr.bf16.mxu0 0
        %869 = vmatpush1.bf16.msra.mxu0 0
        %870 = vmatprep.subr.bf16.mxu0 0
        %871 = vmatpush1.bf16.msra.mxu0 0
        %872 = vmatprep.subr.bf16.mxu0 0
        %873 = vmatpush1.bf16.msra.mxu0 0
        %874 = vmatprep.subr.bf16.mxu0 0
        %875 = vmatpush1.bf16.msra.mxu0 0
        %876 = vmatprep.subr.bf16.mxu0 0
        %877 = vmatpush1.bf16.msra.mxu0 0
        %878 = vmatprep.subr.bf16.mxu0 0
        %879 = vmatpush1.bf16.msra.mxu0 0
        %880 = vmatprep.subr.bf16.mxu0 0
        %881 = vmatpush1.bf16.msra.mxu0 %v866
        %882 = vmatprep.subr.bf16.mxu0 0
        %883 = vmatpush1.bf16.msra.mxu0 %v847
        %884 = vmatprep.subr.bf16.mxu0 0
        %885 = vmatpush2.bf16.msra.mxu0 0
        %886 = vmatprep.subr.bf16.mxu0 0
        %887 = vmatpush2.bf16.msra.mxu0 0
        %888 = vmatprep.subr.bf16.mxu0 0
        %889 = vmatpush2.bf16.msra.mxu0 0
        %890 = vmatprep.subr.bf16.mxu0 0
        %891 = vmatpush2.bf16.msra.mxu0 0
        %892 = vmatprep.subr.bf16.mxu0 0
        %893 = vmatpush2.bf16.msra.mxu0 0
        %894 = vmatprep.subr.bf16.mxu0 0
        %895 = vmatpush2.bf16.msra.mxu0 0
        %896 = vmatprep.subr.bf16.mxu0 0
        %897 = vmatpush2.bf16.msra.mxu0 0
        %898 = vmatprep.subr.bf16.mxu0 0
        %899 = vmatpush2.bf16.msra.mxu0 0
        %900 = vmatprep.mubr.bf16.mxu0 0
        %901 = vmatmul.mubr.bf16.gmra.mxu0 %v851
        %v902 = vpop.f32.mrf.mxu0
        %v903 = vadd.f32 0.0, %v902
        %v904 = vpop.f32.mrf.mxu0
        %v905 = vpop.f32.mrf.mxu0
        %v906 = vadd.f32 0.0, %v905
        %v907 = vpop.f32.mrf.mxu0
        %908 = vmatprep.mubr.bf16.mxu0 0
        %909 = vmatmul.mubr.bf16.gmra.mxu0 %v854
        %v910 = vpop.f32.mrf.mxu0
        %v911 = vadd.f32 0.0, %v910
        %v912 = vpop.f32.mrf.mxu0
        %v913 = vpop.f32.mrf.mxu0
        %v914 = vadd.f32 0.0, %v913
        %v915 = vpop.f32.mrf.mxu0
        %916 = vmatprep.mubr.bf16.mxu0 0
        %917 = vmatmul.mubr.bf16.gmra.mxu0 %v857
        %v918 = vpop.f32.mrf.mxu0
        %v919 = vadd.f32 0.0, %v918
        %v920 = vpop.f32.mrf.mxu0
        %v921 = vpop.f32.mrf.mxu0
        %v922 = vadd.f32 0.0, %v921
        %v923 = vpop.f32.mrf.mxu0
        %924 = vmatprep.mubr.bf16.mxu0 0
        %925 = vmatmul.mubr.bf16.gmra.mxu0 %v860
        %v926 = vpop.f32.mrf.mxu0
        %v927 = vadd.f32 0.0, %v926
        %v928 = vpop.f32.mrf.mxu0
        %v929 = vpop.f32.mrf.mxu0
        %v930 = vadd.f32 0.0, %v929
        %v931 = vpop.f32.mrf.mxu0
        %932 = vmatprep.mubr.bf16.mxu0 0
        %933 = vmatmul.mubr.bf16.gmra.mxu0 %v863
        %v934 = vpop.f32.mrf.mxu0
        %v935 = vadd.f32 0.0, %v934
        %v936 = vpop.f32.mrf.mxu0
        %v937 = vpop.f32.mrf.mxu0
        %v938 = vpop.f32.mrf.mxu0
        %939 = vdwg.mxu0
        %v940 = vadd.f32 %v802, %v903
        %v941 = vadd.f32 %v803, %v906
        %v942 = vadd.f32 %v804, %v911
        %v943 = vadd.f32 %v805, %v914
        %v944 = vadd.f32 %v806, %v919
        %v945 = vadd.f32 %v807, %v922
        %v946 = vadd.f32 %v808, %v927
        %v947 = vadd.f32 %v809, %v930
        %v948 = vadd.f32 %v810, %v935
        %949 = vst.msk [vmem:[#allocation2] sm:$0xff] %vm453, %v940
        %950 = vst.msk [vmem:[#allocation2 + $0x8] sm:$0xff] %vm453, %v941
        %951 = vst.msk [vmem:[#allocation2 + $0x10] sm:$0xff] %vm453, %v942
        %952 = vst.msk [vmem:[#allocation2 + $0x18] sm:$0xff] %vm453, %v943
        %953 = vst.msk [vmem:[#allocation2 + $0x20] sm:$0xff] %vm453, %v944
        %954 = vst.msk [vmem:[#allocation2 + $0x28] sm:$0xff] %vm453, %v945
        %955 = vst.msk [vmem:[#allocation2 + $0x30] sm:$0xff] %vm453, %v946
        %956 = vst.msk [vmem:[#allocation2 + $0x38] sm:$0xff] %vm453, %v947
        %957 = vst.msk [vmem:[#allocation2 + $0x40] sm:$0xff] %vm453, %v948
        %v958 = vld [vmem:[%s311] sm:$0xf]
        %v959 = vld [vmem:[%s311 + $0x4] sm:$0xf]
        %v960 = vld [vmem:[%s311 + $0x8] sm:$0xf]
        %v961 = vld [vmem:[%s311 + $0xc] sm:$0xf]
        %v962 = vld [vmem:[%s311 + $0x10] sm:$0xf]
        %v963 = vld [vmem:[%s311 + $0x14] sm:$0xf]
        %v964 = vld [vmem:[%s311 + $0x18] sm:$0xf]
        %v965 = vld [vmem:[%s311 + $0x1c] sm:$0xf]
        %v966 = vld [vmem:[%s311 + $0x20] sm:$0xf]
        %v967 = vld [vmem:[#allocation2] sm:$0xff]
        %v968 = vld [vmem:[#allocation2 + $0x8] sm:$0xff]
        %v969 = vld [vmem:[#allocation2 + $0x10] sm:$0xff]
        %v970 = vld [vmem:[#allocation2 + $0x18] sm:$0xff]
        %v971 = vld [vmem:[#allocation2 + $0x20] sm:$0xff]
        %v972 = vld [vmem:[#allocation2 + $0x28] sm:$0xff]
        %v973 = vld [vmem:[#allocation2 + $0x30] sm:$0xff]
        %v974 = vld [vmem:[#allocation2 + $0x38] sm:$0xff]
        %v975 = vld [vmem:[#allocation2 + $0x40] sm:$0xff]
        %v976 = vld [vmem:[%s3] sm:$0xf]
        %v977 = vld [vmem:[%s3 + $0x4] sm:$0xf]
        %v978 = vld [vmem:[%s3 + $0x8] sm:$0xf]
        %v979 = vld [vmem:[%s3 + $0xc] sm:$0x3]
        %v989 = vunpack.c.l.b16 %v958
        %v990 = vunpack.c.l.b16 %v959
        %v991 = vunpack.c.l.b16 %v960
        %v992 = vunpack.c.l.b16 %v961
        %v993 = vunpack.c.l.b16 %v962
        %v994 = vunpack.c.l.b16 %v963
        %v995 = vunpack.c.l.b16 %v964
        %v996 = vunpack.c.l.b16 %v965
        %v997 = vunpack.c.l.b16 %v966
        %v998 = vpack.c.b16 %v990, %v989
        %v999 = vpack.c.b16 %v992, %v991
        %v1000 = vpack.c.b16 %v994, %v993
        %v1001 = vpack.c.b16 %v996, %v995
        %v1002 = vpack.c.b16 %v997, %v997
        %v1007 = vunpack.c.l.b16 %v976
        %v1008 = vunpack.c.l.b16 %v977
        %v1009 = vunpack.c.l.b16 %v978
        %v1010 = vunpack.c.l.b16 %v979
        %v1011 = vpack.c.b16 %v1008, %v1007
        %v1012 = vpack.c.b16 %v1010, %v1009
        %v1015 = vsel %vm361, %v998, 0
        %v1018 = vsel %vm361, %v999, 0
        %v1021 = vsel %vm361, %v1000, 0
        %v1024 = vsel %vm361, %v1001, 0
        %v1027 = vsel %vm361, %v1002, 0
        %v1030 = vsel %vm377, %v1012, 0
        %1032 = vmatprep.subr.bf16.mxu0 0
        %1033 = vmatpush1.bf16.msra.mxu0 0
        %1034 = vmatprep.subr.bf16.mxu0 0
        %1035 = vmatpush1.bf16.msra.mxu0 0
        %1036 = vmatprep.subr.bf16.mxu0 0
        %1037 = vmatpush1.bf16.msra.mxu0 0
        %1038 = vmatprep.subr.bf16.mxu0 0
        %1039 = vmatpush1.bf16.msra.mxu0 0
        %1040 = vmatprep.subr.bf16.mxu0 0
        %1041 = vmatpush1.bf16.msra.mxu0 0
        %1042 = vmatprep.subr.bf16.mxu0 0
        %1043 = vmatpush1.bf16.msra.mxu0 0
        %1044 = vmatprep.subr.bf16.mxu0 0
        %1045 = vmatpush1.bf16.msra.mxu0 %v1030
        %1046 = vmatprep.subr.bf16.mxu0 0
        %1047 = vmatpush1.bf16.msra.mxu0 %v1011
        %1048 = vmatprep.subr.bf16.mxu0 0
        %1049 = vmatpush2.bf16.msra.mxu0 0
        %1050 = vmatprep.subr.bf16.mxu0 0
        %1051 = vmatpush2.bf16.msra.mxu0 0
        %1052 = vmatprep.subr.bf16.mxu0 0
        %1053 = vmatpush2.bf16.msra.mxu0 0
        %1054 = vmatprep.subr.bf16.mxu0 0
        %1055 = vmatpush2.bf16.msra.mxu0 0
        %1056 = vmatprep.subr.bf16.mxu0 0
        %1057 = vmatpush2.bf16.msra.mxu0 0
        %1058 = vmatprep.subr.bf16.mxu0 0
        %1059 = vmatpush2.bf16.msra.mxu0 0
        %1060 = vmatprep.subr.bf16.mxu0 0
        %1061 = vmatpush2.bf16.msra.mxu0 0
        %1062 = vmatprep.subr.bf16.mxu0 0
        %1063 = vmatpush2.bf16.msra.mxu0 0
        %1064 = vmatprep.mubr.bf16.mxu0 0
        %1065 = vmatmul.mubr.bf16.gmra.mxu0 %v1015
        %v1066 = vpop.f32.mrf.mxu0
        %v1067 = vadd.f32 0.0, %v1066
        %v1068 = vpop.f32.mrf.mxu0
        %v1069 = vpop.f32.mrf.mxu0
        %v1070 = vadd.f32 0.0, %v1069
        %v1071 = vpop.f32.mrf.mxu0
        %1072 = vmatprep.mubr.bf16.mxu0 0
        %1073 = vmatmul.mubr.bf16.gmra.mxu0 %v1018
        %v1074 = vpop.f32.mrf.mxu0
        %v1075 = vadd.f32 0.0, %v1074
        %v1076 = vpop.f32.mrf.mxu0
        %v1077 = vpop.f32.mrf.mxu0
        %v1078 = vadd.f32 0.0, %v1077
        %v1079 = vpop.f32.mrf.mxu0
        %1080 = vmatprep.mubr.bf16.mxu0 0
        %1081 = vmatmul.mubr.bf16.gmra.mxu0 %v1021
        %v1082 = vpop.f32.mrf.mxu0
        %v1083 = vadd.f32 0.0, %v1082
        %v1084 = vpop.f32.mrf.mxu0
        %v1085 = vpop.f32.mrf.mxu0
        %v1086 = vadd.f32 0.0, %v1085
        %v1087 = vpop.f32.mrf.mxu0
        %1088 = vmatprep.mubr.bf16.mxu0 0
        %1089 = vmatmul.mubr.bf16.gmra.mxu0 %v1024
        %v1090 = vpop.f32.mrf.mxu0
        %v1091 = vadd.f32 0.0, %v1090
        %v1092 = vpop.f32.mrf.mxu0
        %v1093 = vpop.f32.mrf.mxu0
        %v1094 = vadd.f32 0.0, %v1093
        %v1095 = vpop.f32.mrf.mxu0
        %1096 = vmatprep.mubr.bf16.mxu0 0
        %1097 = vmatmul.mubr.bf16.gmra.mxu0 %v1027
        %v1098 = vpop.f32.mrf.mxu0
        %v1099 = vadd.f32 0.0, %v1098
        %v1100 = vpop.f32.mrf.mxu0
        %v1101 = vpop.f32.mrf.mxu0
        %v1102 = vpop.f32.mrf.mxu0
        %1103 = vdwg.mxu0
        %v1104 = vadd.f32 %v967, %v1067
        %v1105 = vadd.f32 %v968, %v1070
        %v1106 = vadd.f32 %v969, %v1075
        %v1107 = vadd.f32 %v970, %v1078
        %v1108 = vadd.f32 %v971, %v1083
        %v1109 = vadd.f32 %v972, %v1086
        %v1110 = vadd.f32 %v973, %v1091
        %v1111 = vadd.f32 %v974, %v1094
        %v1112 = vadd.f32 %v975, %v1099
        %1113 = vst.msk [vmem:[#allocation2] sm:$0xff] %vm453, %v1104
        %1114 = vst.msk [vmem:[#allocation2 + $0x8] sm:$0xff] %vm453, %v1105
        %1115 = vst.msk [vmem:[#allocation2 + $0x10] sm:$0xff] %vm453, %v1106
        %1116 = vst.msk [vmem:[#allocation2 + $0x18] sm:$0xff] %vm453, %v1107
        %1117 = vst.msk [vmem:[#allocation2 + $0x20] sm:$0xff] %vm453, %v1108
        %1118 = vst.msk [vmem:[#allocation2 + $0x28] sm:$0xff] %vm453, %v1109
        %1119 = vst.msk [vmem:[#allocation2 + $0x30] sm:$0xff] %vm453, %v1110
        %1120 = vst.msk [vmem:[#allocation2 + $0x38] sm:$0xff] %vm453, %v1111
        %1121 = vst.msk [vmem:[#allocation2 + $0x40] sm:$0xff] %vm453, %v1112
        %v1122 = vld [vmem:[%s311 + $0x4] sm:$0xf]
        %v1123 = vld [vmem:[%s311 + $0x8] sm:$0xf]
        %v1124 = vld [vmem:[%s311 + $0xc] sm:$0xf]
        %v1125 = vld [vmem:[%s311 + $0x10] sm:$0xf]
        %v1126 = vld [vmem:[%s311 + $0x14] sm:$0xf]
        %v1127 = vld [vmem:[%s311 + $0x18] sm:$0xf]
        %v1128 = vld [vmem:[%s311 + $0x1c] sm:$0xf]
        %v1129 = vld [vmem:[%s311 + $0x20] sm:$0xf]
        %v1130 = vld [vmem:[%s311 + $0x24] sm:$0xf]
        %v1131 = vld [vmem:[#allocation2] sm:$0xff]
        %v1132 = vld [vmem:[#allocation2 + $0x8] sm:$0xff]
        %v1133 = vld [vmem:[#allocation2 + $0x10] sm:$0xff]
        %v1134 = vld [vmem:[#allocation2 + $0x18] sm:$0xff]
        %v1135 = vld [vmem:[#allocation2 + $0x20] sm:$0xff]
        %v1136 = vld [vmem:[#allocation2 + $0x28] sm:$0xff]
        %v1137 = vld [vmem:[#allocation2 + $0x30] sm:$0xff]
        %v1138 = vld [vmem:[#allocation2 + $0x38] sm:$0xff]
        %v1139 = vld [vmem:[#allocation2 + $0x40] sm:$0xff]
        %s1140 = scalar_lea.vmem %s3, 16
        %v1141 = vld [vmem:[%s1140] sm:$0xf]
        %v1142 = vld [vmem:[%s1140 + $0x4] sm:$0xf]
        %v1143 = vld [vmem:[%s1140 + $0x8] sm:$0xf]
        %v1144 = vld [vmem:[%s1140 + $0xc] sm:$0x3]
        %v1154 = vunpack.c.l.b16 %v1122
        %v1155 = vunpack.c.l.b16 %v1123
        %v1156 = vunpack.c.l.b16 %v1124
        %v1157 = vunpack.c.l.b16 %v1125
        %v1158 = vunpack.c.l.b16 %v1126
        %v1159 = vunpack.c.l.b16 %v1127
        %v1160 = vunpack.c.l.b16 %v1128
        %v1161 = vunpack.c.l.b16 %v1129
        %v1162 = vunpack.c.l.b16 %v1130
        %v1163 = vpack.c.b16 %v1155, %v1154
        %v1164 = vpack.c.b16 %v1157, %v1156
        %v1165 = vpack.c.b16 %v1159, %v1158
        %v1166 = vpack.c.b16 %v1161, %v1160
        %v1167 = vpack.c.b16 %v1162, %v1162
        %v1172 = vunpack.c.l.b16 %v1141
        %v1173 = vunpack.c.l.b16 %v1142
        %v1174 = vunpack.c.l.b16 %v1143
        %v1175 = vunpack.c.l.b16 %v1144
        %v1176 = vpack.c.b16 %v1173, %v1172
        %v1177 = vpack.c.b16 %v1175, %v1174
        %v1180 = vsel %vm361, %v1163, 0
        %v1183 = vsel %vm361, %v1164, 0
        %v1186 = vsel %vm361, %v1165, 0
        %v1189 = vsel %vm361, %v1166, 0
        %v1192 = vsel %vm361, %v1167, 0
        %v1195 = vsel %vm377, %v1177, 0
        %1197 = vmatprep.subr.bf16.mxu0 0
        %1198 = vmatpush1.bf16.msra.mxu0 0
        %1199 = vmatprep.subr.bf16.mxu0 0
        %1200 = vmatpush1.bf16.msra.mxu0 0
        %1201 = vmatprep.subr.bf16.mxu0 0
        %1202 = vmatpush1.bf16.msra.mxu0 0
        %1203 = vmatprep.subr.bf16.mxu0 0
        %1204 = vmatpush1.bf16.msra.mxu0 0
        %1205 = vmatprep.subr.bf16.mxu0 0
        %1206 = vmatpush1.bf16.msra.mxu0 0
        %1207 = vmatprep.subr.bf16.mxu0 0
        %1208 = vmatpush1.bf16.msra.mxu0 0
        %1209 = vmatprep.subr.bf16.mxu0 0
        %1210 = vmatpush1.bf16.msra.mxu0 %v1195
        %1211 = vmatprep.subr.bf16.mxu0 0
        %1212 = vmatpush1.bf16.msra.mxu0 %v1176
        %1213 = vmatprep.subr.bf16.mxu0 0
        %1214 = vmatpush2.bf16.msra.mxu0 0
        %1215 = vmatprep.subr.bf16.mxu0 0
        %1216 = vmatpush2.bf16.msra.mxu0 0
        %1217 = vmatprep.subr.bf16.mxu0 0
        %1218 = vmatpush2.bf16.msra.mxu0 0
        %1219 = vmatprep.subr.bf16.mxu0 0
        %1220 = vmatpush2.bf16.msra.mxu0 0
        %1221 = vmatprep.subr.bf16.mxu0 0
        %1222 = vmatpush2.bf16.msra.mxu0 0
        %1223 = vmatprep.subr.bf16.mxu0 0
        %1224 = vmatpush2.bf16.msra.mxu0 0
        %1225 = vmatprep.subr.bf16.mxu0 0
        %1226 = vmatpush2.bf16.msra.mxu0 0
        %1227 = vmatprep.subr.bf16.mxu0 0
        %1228 = vmatpush2.bf16.msra.mxu0 0
        %1229 = vmatprep.mubr.bf16.mxu0 0
        %1230 = vmatmul.mubr.bf16.gmra.mxu0 %v1180
        %v1231 = vpop.f32.mrf.mxu0
        %v1232 = vadd.f32 0.0, %v1231
        %v1233 = vpop.f32.mrf.mxu0
        %v1234 = vpop.f32.mrf.mxu0
        %v1235 = vadd.f32 0.0, %v1234
        %v1236 = vpop.f32.mrf.mxu0
        %1237 = vmatprep.mubr.bf16.mxu0 0
        %1238 = vmatmul.mubr.bf16.gmra.mxu0 %v1183
        %v1239 = vpop.f32.mrf.mxu0
        %v1240 = vadd.f32 0.0, %v1239
        %v1241 = vpop.f32.mrf.mxu0
        %v1242 = vpop.f32.mrf.mxu0
        %v1243 = vadd.f32 0.0, %v1242
        %v1244 = vpop.f32.mrf.mxu0
        %1245 = vmatprep.mubr.bf16.mxu0 0
        %1246 = vmatmul.mubr.bf16.gmra.mxu0 %v1186
        %v1247 = vpop.f32.mrf.mxu0
        %v1248 = vadd.f32 0.0, %v1247
        %v1249 = vpop.f32.mrf.mxu0
        %v1250 = vpop.f32.mrf.mxu0
        %v1251 = vadd.f32 0.0, %v1250
        %v1252 = vpop.f32.mrf.mxu0
        %1253 = vmatprep.mubr.bf16.mxu0 0
        %1254 = vmatmul.mubr.bf16.gmra.mxu0 %v1189
        %v1255 = vpop.f32.mrf.mxu0
        %v1256 = vadd.f32 0.0, %v1255
        %v1257 = vpop.f32.mrf.mxu0
        %v1258 = vpop.f32.mrf.mxu0
        %v1259 = vadd.f32 0.0, %v1258
        %v1260 = vpop.f32.mrf.mxu0
        %1261 = vmatprep.mubr.bf16.mxu0 0
        %1262 = vmatmul.mubr.bf16.gmra.mxu0 %v1192
        %v1263 = vpop.f32.mrf.mxu0
        %v1264 = vadd.f32 0.0, %v1263
        %v1265 = vpop.f32.mrf.mxu0
        %v1266 = vpop.f32.mrf.mxu0
        %v1267 = vpop.f32.mrf.mxu0
        %1268 = vdwg.mxu0
        %v1269 = vadd.f32 %v1131, %v1232
        %v1270 = vadd.f32 %v1132, %v1235
        %v1271 = vadd.f32 %v1133, %v1240
        %v1272 = vadd.f32 %v1134, %v1243
        %v1273 = vadd.f32 %v1135, %v1248
        %v1274 = vadd.f32 %v1136, %v1251
        %v1275 = vadd.f32 %v1137, %v1256
        %v1276 = vadd.f32 %v1138, %v1259
        %v1277 = vadd.f32 %v1139, %v1264
        %1278 = vst.msk [vmem:[#allocation2] sm:$0xff] %vm453, %v1269
        %1279 = vst.msk [vmem:[#allocation2 + $0x8] sm:$0xff] %vm453, %v1270
        %1280 = vst.msk [vmem:[#allocation2 + $0x10] sm:$0xff] %vm453, %v1271
        %1281 = vst.msk [vmem:[#allocation2 + $0x18] sm:$0xff] %vm453, %v1272
        %1282 = vst.msk [vmem:[#allocation2 + $0x20] sm:$0xff] %vm453, %v1273
        %1283 = vst.msk [vmem:[#allocation2 + $0x28] sm:$0xff] %vm453, %v1274
        %1284 = vst.msk [vmem:[#allocation2 + $0x30] sm:$0xff] %vm453, %v1275
        %1285 = vst.msk [vmem:[#allocation2 + $0x38] sm:$0xff] %vm453, %v1276
        %1286 = vst.msk [vmem:[#allocation2 + $0x40] sm:$0xff] %vm453, %v1277
        %v1287 = vld [vmem:[%s311 + $0x8] sm:$0xf]
        %v1288 = vld [vmem:[%s311 + $0xc] sm:$0xf]
        %v1289 = vld [vmem:[%s311 + $0x10] sm:$0xf]
        %v1290 = vld [vmem:[%s311 + $0x14] sm:$0xf]
        %v1291 = vld [vmem:[%s311 + $0x18] sm:$0xf]
        %v1292 = vld [vmem:[%s311 + $0x1c] sm:$0xf]
        %v1293 = vld [vmem:[%s311 + $0x20] sm:$0xf]
        %v1294 = vld [vmem:[%s311 + $0x24] sm:$0xf]
        %v1295 = vld [vmem:[%s311 + $0x28] sm:$0xf]
        %v1296 = vld [vmem:[#allocation2] sm:$0xff]
        %v1297 = vld [vmem:[#allocation2 + $0x8] sm:$0xff]
        %v1298 = vld [vmem:[#allocation2 + $0x10] sm:$0xff]
        %v1299 = vld [vmem:[#allocation2 + $0x18] sm:$0xff]
        %v1300 = vld [vmem:[#allocation2 + $0x20] sm:$0xff]
        %v1301 = vld [vmem:[#allocation2 + $0x28] sm:$0xff]
        %v1302 = vld [vmem:[#allocation2 + $0x30] sm:$0xff]
        %v1303 = vld [vmem:[#allocation2 + $0x38] sm:$0xff]
        %v1304 = vld [vmem:[#allocation2 + $0x40] sm:$0xff]
        %s1305 = scalar_lea.vmem %s3, 32
        %v1306 = vld [vmem:[%s1305] sm:$0xf]
        %v1307 = vld [vmem:[%s1305 + $0x4] sm:$0xf]
        %v1308 = vld [vmem:[%s1305 + $0x8] sm:$0xf]
        %v1309 = vld [vmem:[%s1305 + $0xc] sm:$0x3]
        %v1319 = vunpack.c.l.b16 %v1287
        %v1320 = vunpack.c.l.b16 %v1288
        %v1321 = vunpack.c.l.b16 %v1289
        %v1322 = vunpack.c.l.b16 %v1290
        %v1323 = vunpack.c.l.b16 %v1291
        %v1324 = vunpack.c.l.b16 %v1292
        %v1325 = vunpack.c.l.b16 %v1293
        %v1326 = vunpack.c.l.b16 %v1294
        %v1327 = vunpack.c.l.b16 %v1295
        %v1328 = vpack.c.b16 %v1320, %v1319
        %v1329 = vpack.c.b16 %v1322, %v1321
        %v1330 = vpack.c.b16 %v1324, %v1323
        %v1331 = vpack.c.b16 %v1326, %v1325
        %v1332 = vpack.c.b16 %v1327, %v1327
        %v1337 = vunpack.c.l.b16 %v1306
        %v1338 = vunpack.c.l.b16 %v1307
        %v1339 = vunpack.c.l.b16 %v1308
        %v1340 = vunpack.c.l.b16 %v1309
        %v1341 = vpack.c.b16 %v1338, %v1337
        %v1342 = vpack.c.b16 %v1340, %v1339
        %v1345 = vsel %vm361, %v1328, 0
        %v1348 = vsel %vm361, %v1329, 0
        %v1351 = vsel %vm361, %v1330, 0
        %v1354 = vsel %vm361, %v1331, 0
        %v1357 = vsel %vm361, %v1332, 0
        %v1360 = vsel %vm377, %v1342, 0
        %1362 = vmatprep.subr.bf16.mxu0 0
        %1363 = vmatpush1.bf16.msra.mxu0 0
        %1364 = vmatprep.subr.bf16.mxu0 0
        %1365 = vmatpush1.bf16.msra.mxu0 0
        %1366 = vmatprep.subr.bf16.mxu0 0
        %1367 = vmatpush1.bf16.msra.mxu0 0
        %1368 = vmatprep.subr.bf16.mxu0 0
        %1369 = vmatpush1.bf16.msra.mxu0 0
        %1370 = vmatprep.subr.bf16.mxu0 0
        %1371 = vmatpush1.bf16.msra.mxu0 0
        %1372 = vmatprep.subr.bf16.mxu0 0
        %1373 = vmatpush1.bf16.msra.mxu0 0
        %1374 = vmatprep.subr.bf16.mxu0 0
        %1375 = vmatpush1.bf16.msra.mxu0 %v1360
        %1376 = vmatprep.subr.bf16.mxu0 0
        %1377 = vmatpush1.bf16.msra.mxu0 %v1341
        %1378 = vmatprep.subr.bf16.mxu0 0
        %1379 = vmatpush2.bf16.msra.mxu0 0
        %1380 = vmatprep.subr.bf16.mxu0 0
        %1381 = vmatpush2.bf16.msra.mxu0 0
        %1382 = vmatprep.subr.bf16.mxu0 0
        %1383 = vmatpush2.bf16.msra.mxu0 0
        %1384 = vmatprep.subr.bf16.mxu0 0
        %1385 = vmatpush2.bf16.msra.mxu0 0
        %1386 = vmatprep.subr.bf16.mxu0 0
        %1387 = vmatpush2.bf16.msra.mxu0 0
        %1388 = vmatprep.subr.bf16.mxu0 0
        %1389 = vmatpush2.bf16.msra.mxu0 0
        %1390 = vmatprep.subr.bf16.mxu0 0
        %1391 = vmatpush2.bf16.msra.mxu0 0
        %1392 = vmatprep.subr.bf16.mxu0 0
        %1393 = vmatpush2.bf16.msra.mxu0 0
        %1394 = vmatprep.mubr.bf16.mxu0 0
        %1395 = vmatmul.mubr.bf16.gmra.mxu0 %v1345
        %v1396 = vpop.f32.mrf.mxu0
        %v1397 = vadd.f32 0.0, %v1396
        %v1398 = vpop.f32.mrf.mxu0
        %v1399 = vpop.f32.mrf.mxu0
        %v1400 = vadd.f32 0.0, %v1399
        %v1401 = vpop.f32.mrf.mxu0
        %1402 = vmatprep.mubr.bf16.mxu0 0
        %1403 = vmatmul.mubr.bf16.gmra.mxu0 %v1348
        %v1404 = vpop.f32.mrf.mxu0
        %v1405 = vadd.f32 0.0, %v1404
        %v1406 = vpop.f32.mrf.mxu0
        %v1407 = vpop.f32.mrf.mxu0
        %v1408 = vadd.f32 0.0, %v1407
        %v1409 = vpop.f32.mrf.mxu0
        %1410 = vmatprep.mubr.bf16.mxu0 0
        %1411 = vmatmul.mubr.bf16.gmra.mxu0 %v1351
        %v1412 = vpop.f32.mrf.mxu0
        %v1413 = vadd.f32 0.0, %v1412
        %v1414 = vpop.f32.mrf.mxu0
        %v1415 = vpop.f32.mrf.mxu0
        %v1416 = vadd.f32 0.0, %v1415
        %v1417 = vpop.f32.mrf.mxu0
        %1418 = vmatprep.mubr.bf16.mxu0 0
        %1419 = vmatmul.mubr.bf16.gmra.mxu0 %v1354
        %v1420 = vpop.f32.mrf.mxu0
        %v1421 = vadd.f32 0.0, %v1420
        %v1422 = vpop.f32.mrf.mxu0
        %v1423 = vpop.f32.mrf.mxu0
        %v1424 = vadd.f32 0.0, %v1423
        %v1425 = vpop.f32.mrf.mxu0
        %1426 = vmatprep.mubr.bf16.mxu0 0
        %1427 = vmatmul.mubr.bf16.gmra.mxu0 %v1357
        %v1428 = vpop.f32.mrf.mxu0
        %v1429 = vadd.f32 0.0, %v1428
        %v1430 = vpop.f32.mrf.mxu0
        %v1431 = vpop.f32.mrf.mxu0
        %v1432 = vpop.f32.mrf.mxu0
        %1433 = vdwg.mxu0
        %v1434 = vadd.f32 %v1296, %v1397
        %v1435 = vadd.f32 %v1297, %v1400
        %v1436 = vadd.f32 %v1298, %v1405
        %v1437 = vadd.f32 %v1299, %v1408
        %v1438 = vadd.f32 %v1300, %v1413
        %v1439 = vadd.f32 %v1301, %v1416
        %v1440 = vadd.f32 %v1302, %v1421
        %v1441 = vadd.f32 %v1303, %v1424
        %v1442 = vadd.f32 %v1304, %v1429
        %1443 = vst.msk [vmem:[#allocation2] sm:$0xff] %vm453, %v1434
        %1444 = vst.msk [vmem:[#allocation2 + $0x8] sm:$0xff] %vm453, %v1435
        %1445 = vst.msk [vmem:[#allocation2 + $0x10] sm:$0xff] %vm453, %v1436
        %1446 = vst.msk [vmem:[#allocation2 + $0x18] sm:$0xff] %vm453, %v1437
        %1447 = vst.msk [vmem:[#allocation2 + $0x20] sm:$0xff] %vm453, %v1438
        %1448 = vst.msk [vmem:[#allocation2 + $0x28] sm:$0xff] %vm453, %v1439
        %1449 = vst.msk [vmem:[#allocation2 + $0x30] sm:$0xff] %vm453, %v1440
        %1450 = vst.msk [vmem:[#allocation2 + $0x38] sm:$0xff] %vm453, %v1441
        %1451 = vst.msk [vmem:[#allocation2 + $0x40] sm:$0xff] %vm453, %v1442
        %v1452 = vld [vmem:[#allocation2] sm:$0xff]
        %v1453 = vld [vmem:[#allocation2 + $0x8] sm:$0xff]
        %v1454 = vld [vmem:[#allocation2 + $0x10] sm:$0xff]
        %v1455 = vld [vmem:[#allocation2 + $0x18] sm:$0xff]
        %v1456 = vld [vmem:[#allocation2 + $0x20] sm:$0xff]
        %v1457 = vld [vmem:[#allocation2 + $0x28] sm:$0xff]
        %v1458 = vld [vmem:[#allocation2 + $0x30] sm:$0xff]
        %v1459 = vld [vmem:[#allocation2 + $0x38] sm:$0xff]
        %v1460 = vld [vmem:[#allocation2 + $0x40] sm:$0xff]
        %v1461 = vld [vmem:[%s4] sm:$0x1]
        %v1463 = vlaneseq
        %v1464 = vshrl.u32 %v1463, 7
        %v1465 = vsub.s32 0, %v1464
        %v1466 = vrot.slane %v1461, %v1465
        %v1468 = vmul.f32 %v1452, %v1466
        %v1469 = vmul.f32 %v1453, %v1466
        %v1470 = vmul.f32 %v1454, %v1466
        %v1471 = vmul.f32 %v1455, %v1466
        %v1472 = vmul.f32 %v1456, %v1466
        %v1473 = vmul.f32 %v1457, %v1466
        %v1474 = vmul.f32 %v1458, %v1466
        %v1475 = vmul.f32 %v1459, %v1466
        %v1476 = vmul.f32 %v1460, %v1466
        %v1477 = vld [vmem:[%s5] sm:$0x1]
        %v1479 = vlaneseq
        %v1480 = vshrl.u32 %v1479, 7
        %v1481 = vsub.s32 0, %v1480
        %v1482 = vrot.slane %v1477, %v1481
        %v1484 = vadd.f32 %v1468, %v1482
        %v1485 = vadd.f32 %v1469, %v1482
        %v1486 = vadd.f32 %v1470, %v1482
        %v1487 = vadd.f32 %v1471, %v1482
        %v1488 = vadd.f32 %v1472, %v1482
        %v1489 = vadd.f32 %v1473, %v1482
        %v1490 = vadd.f32 %v1474, %v1482
        %v1491 = vadd.f32 %v1475, %v1482
        %v1492 = vadd.f32 %v1476, %v1482
        %v1493 = vmax.f32 %v1484, 0.0
        %v1494 = vmax.f32 %v1485, 0.0
        %v1495 = vmax.f32 %v1486, 0.0
        %v1496 = vmax.f32 %v1487, 0.0
        %v1497 = vmax.f32 %v1488, 0.0
        %v1498 = vmax.f32 %v1489, 0.0
        %v1499 = vmax.f32 %v1490, 0.0
        %v1500 = vmax.f32 %v1491, 0.0
        %v1501 = vmax.f32 %v1492, 0.0
        %s1502 = smul.u32 %s25, 8
        %s1503 = ssub.s32 %s1502, 1
        %v1504 = vstv %s1503
        %v1505 = vadd.s32 %v1504, 1
        %v1506 = vadd.s32 %v1504, 2
        %v1507 = vadd.s32 %v1504, 3
        %v1508 = vadd.s32 %v1504, 4
        %v1509 = vadd.s32 %v1504, 5
        %v1510 = vadd.s32 %v1504, 6
        %v1511 = vadd.s32 %v1504, 7
        %v1512 = vadd.s32 %v1504, 8
        %vm1513 = vcmp.ge.s32.totalorder %v1504, 0
        %vm1514 = vcmp.ge.s32.totalorder %v1505, 0
        %vm1515 = vcmp.ge.s32.totalorder %v1506, 0
        %vm1516 = vcmp.ge.s32.totalorder %v1507, 0
        %vm1517 = vcmp.ge.s32.totalorder %v1508, 0
        %vm1518 = vcmp.ge.s32.totalorder %v1509, 0
        %vm1519 = vcmp.ge.s32.totalorder %v1510, 0
        %vm1520 = vcmp.ge.s32.totalorder %v1511, 0
        %vm1521 = vcmp.ge.s32.totalorder %v1512, 0
        %vm1522 = vcmp.lt.s32.totalorder %v1504, 8
        %vm1523 = vcmp.lt.s32.totalorder %v1505, 8
        %vm1524 = vcmp.lt.s32.totalorder %v1506, 8
        %vm1525 = vcmp.lt.s32.totalorder %v1507, 8
        %vm1526 = vcmp.lt.s32.totalorder %v1508, 8
        %vm1527 = vcmp.lt.s32.totalorder %v1509, 8
        %vm1528 = vcmp.lt.s32.totalorder %v1510, 8
        %vm1529 = vcmp.lt.s32.totalorder %v1511, 8
        %vm1530 = vcmp.lt.s32.totalorder %v1512, 8
        %vm1531 = vmand %vm1513, %vm1522
        %vm1532 = vmand %vm1514, %vm1523
        %vm1533 = vmand %vm1515, %vm1524
        %vm1534 = vmand %vm1516, %vm1525
        %vm1535 = vmand %vm1517, %vm1526
        %vm1536 = vmand %vm1518, %vm1527
        %vm1537 = vmand %vm1519, %vm1528
        %vm1538 = vmand %vm1520, %vm1529
        %vm1539 = vmand %vm1521, %vm1530
        %v1540 = vsel %vm1531, %v1493, 0.0
        %v1541 = vsel %vm1532, %v1494, 0.0
        %v1542 = vsel %vm1533, %v1495, 0.0
        %v1543 = vsel %vm1534, %v1496, 0.0
        %v1544 = vsel %vm1535, %v1497, 0.0
        %v1545 = vsel %vm1536, %v1498, 0.0
        %v1546 = vsel %vm1537, %v1499, 0.0
        %v1547 = vsel %vm1538, %v1500, 0.0
        %v1548 = vsel %vm1539, %v1501, 0.0
        %1549 = vst.msk [vmem:[#allocation3] sm:$0xff] %vm453, 0.0
        %vm1550 = vcmask 253952
        %1551 = vst.msk [vmem:[#allocation3 + $0x8] sm:$0x1] %vm1550, 0.0
        %1552 = vst.msk [vmem:[#allocation3 + $0x10] sm:$0xff] %vm453, 0.0
        %1553 = vst.msk [vmem:[#allocation3 + $0x18] sm:$0x1] %vm1550, 0.0
        %1554 = vst.msk [vmem:[#allocation3 + $0x20] sm:$0xff] %vm453, 0.0
        %1555 = vst.msk [vmem:[#allocation3 + $0x28] sm:$0x1] %vm1550, 0.0
        %1556 = vst.msk [vmem:[#allocation3 + $0x30] sm:$0xff] %vm453, 0.0
        %1557 = vst.msk [vmem:[#allocation3 + $0x38] sm:$0x1] %vm1550, 0.0
        %1558 = vst.msk [vmem:[#allocation3 + $0x40] sm:$0xff] %vm453, 0.0
        %1559 = vst.msk [vmem:[#allocation3 + $0x48] sm:$0x1] %vm1550, 0.0
        %1560 = vst.msk [vmem:[#allocation3 + $0x50] sm:$0xff] %vm453, 0.0
        %1561 = vst.msk [vmem:[#allocation3 + $0x58] sm:$0x1] %vm1550, 0.0
        %1562 = vst.msk [vmem:[#allocation3 + $0x60] sm:$0xff] %vm453, 0.0
        %1563 = vst.msk [vmem:[#allocation3 + $0x68] sm:$0x1] %vm1550, 0.0
        %1564 = vst.msk [vmem:[#allocation3 + $0x70] sm:$0xff] %vm453, 0.0
        %1565 = vst.msk [vmem:[#allocation3 + $0x78] sm:$0x1] %vm1550, 0.0
        %1566 = vst.msk [vmem:[#allocation3 + $0x80] sm:$0xff] %vm453, 0.0
        %1567 = vst.msk [vmem:[#allocation3 + $0x88] sm:$0x1] %vm1550, 0.0
        %1568 = vst.msk [vmem:[#allocation3 + $0x1] sm:$0xff] %vm453, %v1540
        %1569 = vst.msk [vmem:[#allocation3 + $0x11] sm:$0xff] %vm453, %v1541
        %1570 = vst.msk [vmem:[#allocation3 + $0x21] sm:$0xff] %vm453, %v1542
        %1571 = vst.msk [vmem:[#allocation3 + $0x31] sm:$0xff] %vm453, %v1543
        %1572 = vst.msk [vmem:[#allocation3 + $0x41] sm:$0xff] %vm453, %v1544
        %1573 = vst.msk [vmem:[#allocation3 + $0x51] sm:$0xff] %vm453, %v1545
        %1574 = vst.msk [vmem:[#allocation3 + $0x61] sm:$0xff] %vm453, %v1546
        %1575 = vst.msk [vmem:[#allocation3 + $0x71] sm:$0xff] %vm453, %v1547
        %1576 = vst.msk [vmem:[#allocation3 + $0x81] sm:$0xff] %vm453, %v1548
        %v1577 = vld [vmem:[#allocation3] ss:$2 sm:$0xf]
        %s1578 = scalar_lea.vmem [#allocation3], 16
        %v1579 = vld [vmem:[%s1578] ss:$2 sm:$0xf]
        %s1580 = scalar_lea.vmem [#allocation3], 32
        %v1581 = vld [vmem:[%s1580] ss:$2 sm:$0xf]
        %s1582 = scalar_lea.vmem [#allocation3], 48
        %v1583 = vld [vmem:[%s1582] ss:$2 sm:$0xf]
        %s1584 = scalar_lea.vmem [#allocation3], 64
        %v1585 = vld [vmem:[%s1584] ss:$2 sm:$0xf]
        %s1586 = scalar_lea.vmem [#allocation3], 80
        %v1587 = vld [vmem:[%s1586] ss:$2 sm:$0xf]
        %s1588 = scalar_lea.vmem [#allocation3], 96
        %v1589 = vld [vmem:[%s1588] ss:$2 sm:$0xf]
        %s1590 = scalar_lea.vmem [#allocation3], 112
        %v1591 = vld [vmem:[%s1590] ss:$2 sm:$0xf]
        %s1592 = scalar_lea.vmem [#allocation3], 128
        %v1593 = vld [vmem:[%s1592] ss:$2 sm:$0xf]
        %s1594 = scalar_lea.vmem [#allocation3], 1
        %v1595 = vld [vmem:[%s1594] ss:$2 sm:$0xf]
        %s1596 = scalar_lea.vmem [#allocation3], 17
        %v1597 = vld [vmem:[%s1596] ss:$2 sm:$0xf]
        %s1598 = scalar_lea.vmem [#allocation3], 33
        %v1599 = vld [vmem:[%s1598] ss:$2 sm:$0xf]
        %s1600 = scalar_lea.vmem [#allocation3], 49
        %v1601 = vld [vmem:[%s1600] ss:$2 sm:$0xf]
        %s1602 = scalar_lea.vmem [#allocation3], 65
        %v1603 = vld [vmem:[%s1602] ss:$2 sm:$0xf]
        %s1604 = scalar_lea.vmem [#allocation3], 81
        %v1605 = vld [vmem:[%s1604] ss:$2 sm:$0xf]
        %s1606 = scalar_lea.vmem [#allocation3], 97
        %v1607 = vld [vmem:[%s1606] ss:$2 sm:$0xf]
        %s1608 = scalar_lea.vmem [#allocation3], 113
        %v1609 = vld [vmem:[%s1608] ss:$2 sm:$0xf]
        %s1610 = scalar_lea.vmem [#allocation3], 129
        %v1611 = vld [vmem:[%s1610] ss:$2 sm:$0xf]
        %s1612 = scalar_lea.vmem [#allocation3], 2
        %v1613 = vld [vmem:[%s1612] ss:$2 sm:$0xf]
        %s1614 = scalar_lea.vmem [#allocation3], 18
        %v1615 = vld [vmem:[%s1614] ss:$2 sm:$0xf]
        %s1616 = scalar_lea.vmem [#allocation3], 34
        %v1617 = vld [vmem:[%s1616] ss:$2 sm:$0xf]
        %s1618 = scalar_lea.vmem [#allocation3], 50
        %v1619 = vld [vmem:[%s1618] ss:$2 sm:$0xf]
        %s1620 = scalar_lea.vmem [#allocation3], 66
        %v1621 = vld [vmem:[%s1620] ss:$2 sm:$0xf]
        %s1622 = scalar_lea.vmem [#allocation3], 82
        %v1623 = vld [vmem:[%s1622] ss:$2 sm:$0xf]
        %s1624 = scalar_lea.vmem [#allocation3], 98
        %v1625 = vld [vmem:[%s1624] ss:$2 sm:$0xf]
        %s1626 = scalar_lea.vmem [#allocation3], 114
        %v1627 = vld [vmem:[%s1626] ss:$2 sm:$0xf]
        %s1628 = scalar_lea.vmem [#allocation3], 130
        %v1629 = vld [vmem:[%s1628] ss:$2 sm:$0xf]
        %v1630 = vmax.f32 %v1577, %v1595
        %v1631 = vmax.f32 %v1579, %v1597
        %v1632 = vmax.f32 %v1581, %v1599
        %v1633 = vmax.f32 %v1583, %v1601
        %v1634 = vmax.f32 %v1585, %v1603
        %v1635 = vmax.f32 %v1587, %v1605
        %v1636 = vmax.f32 %v1589, %v1607
        %v1637 = vmax.f32 %v1591, %v1609
        %v1638 = vmax.f32 %v1593, %v1611
        %v1639 = vmax.f32 %v1630, %v1613
        %v1640 = vmax.f32 %v1631, %v1615
        %v1641 = vmax.f32 %v1632, %v1617
        %v1642 = vmax.f32 %v1633, %v1619
        %v1643 = vmax.f32 %v1634, %v1621
        %v1644 = vmax.f32 %v1635, %v1623
        %v1645 = vmax.f32 %v1636, %v1625
        %v1646 = vmax.f32 %v1637, %v1627
        %v1647 = vmax.f32 %v1638, %v1629
        %vm1648 = vcmask 257024
        %v1649 = vsel %vm1648, %v1639, -inf
        %v1650 = vsel %vm1648, %v1640, -inf
        %v1651 = vmax.f32 %v1649, %v1650
        %v1652 = vsel %vm1648, %v1641, -inf
        %v1653 = vsel %vm1648, %v1642, -inf
        %v1654 = vmax.f32 %v1652, %v1653
        %v1655 = vsel %vm1648, %v1643, -inf
        %v1656 = vsel %vm1648, %v1644, -inf
        %v1657 = vmax.f32 %v1655, %v1656
        %v1658 = vsel %vm1648, %v1645, -inf
        %v1659 = vsel %vm1648, %v1646, -inf
        %v1660 = vmax.f32 %v1658, %v1659
        %v1661 = vmax.f32 %v1650, %v1652
        %v1662 = vmax.f32 %v1653, %v1655
        %v1663 = vmax.f32 %v1656, %v1658
        %v1664 = vsel %vm1648, %v1647, -inf
        %v1665 = vmax.f32 %v1659, %v1664
        %v1666 = vmax.f32 %v1651, %v1661
        %v1667 = vmax.f32 %v1654, %v1662
        %v1668 = vmax.f32 %v1657, %v1663
        %v1669 = vmax.f32 %v1660, %v1665
        %1670 = vst.msk [vmem:[%s293] sm:$0xf] %vm1648, %v1666
        %1671 = vst.msk [vmem:[%s293 + $0x4] sm:$0xf] %vm1648, %v1667
        %1672 = vst.msk [vmem:[%s293 + $0x8] sm:$0xf] %vm1648, %v1668
        %1673 = vst.msk [vmem:[%s293 + $0xc] sm:$0xf] %vm1648, %v1669
        %s1674 = sand.u32 %s182, 1
        %s1675 = scalar_lea.sflag [#allocation5], %s1674
        %s1676 = sand.u32 %s182, 1
        %s1677 = smul.addr %s1676, 16
        %s1678 = scalar_lea.vmem [#allocation4], %s1677
        // Predicated region
        $region45: #{tpu_custom_call.1} parent=43 // pred_check
          %p1679 = pneg %p192
        $region46: #{tpu_custom_call.1} parent=43 // pred_check_branch
          %1681 = sbr.rel (%p1679) target = $region48
        $region47: #{tpu_custom_call.1} parent=43 // pred_region
          %s1682 = smul.u32 4, %s25
          %s1684 = ssub.s32 256, 256
          %1685 = vsyncadd %s1675, %s1684
          %s1686 = smul.addr %s24, 4
          %s1687 = sadd.s32 %s1682, %s1686
          %s1688 = smul.addr %s1687, 64
          %s1689 = scalar_lea.hbm %s6, %s1688
          %s1690 = sshll.u32 %s1678, 4
          %s1691 = int_to_ptr.vmem [resolvable:$true] %s1690
          %1696 = dma.vmem_to_hbm [thread:$0]  %s1691, 256, %s1689, %s1675, 64, 64, 4
        $region48: #{tpu_custom_call.1} parent=43 // pred_fallthru
          _
      $region44: #{tpu_custom_call.1} parent=5 // pred_fallthru
        _
      %p1697 = scmp.le.s32.totalorder 2, %s15
      // Predicated region
      $region49: #{tpu_custom_call.1} parent=5 // pred_check
        %p1698 = pneg %p1697
      $region50: #{tpu_custom_call.1} parent=5 // pred_check_branch
        %1700 = sbr.rel (%p1698) target = $region52
      $region51: #{tpu_custom_call.1} parent=5 // pred_region
        %s1701 = ssub.s32 %s15, 2
        // Predicated region
        $region53: #{tpu_custom_call.1} parent=51 // pred_check
          %p1702 = pneg %p198
        $region54: #{tpu_custom_call.1} parent=51 // pred_check_branch
          %1704 = sbr.rel (%p1702) target = $region56
        $region55: #{tpu_custom_call.1} parent=51 // pred_region
          %s1705 = sand.u32 %s183, 1
          %s1706 = scalar_lea.sflag [#allocation5], %s1705
          %s1707 = sand.u32 %s183, 1
          %s1708 = smul.addr %s1707, 16
          %s1709 = scalar_lea.vmem [#allocation4], %s1708
          %1710 = dma.done %s1706, 256
        $region56: #{tpu_custom_call.1} parent=51 // pred_fallthru
          _
      $region52: #{tpu_custom_call.1} parent=5 // pred_fallthru
        _
    $region6: #{tpu_custom_call.1} parent=1 // loop_footer
      %s19 = sadd.s32 1, %s15
    $region7: #{tpu_custom_call.1} parent=1 // loop_footer_branch
      %14 = sbr.rel target = $region3
    $region8: #{tpu_custom_call.1} parent=1 // loop_exit
      _
    %1711 = vsyncpa [#allocation5], 1
    %s1712 = scalar_lea.sflag [#allocation5], 1
    %1713 = vsyncpa %s1712, 1

</llo_original>
